<compile_context>
chip_gen: v5e
topology: v5e:2x2
jax: 0.10.0
libtpu: 0.0.40
codegen_flags: <defaults>
</compile_context>

<pallas_src>
import math

import jax
import jax.numpy as jnp
import numpy as np
from jax import lax
from jax.experimental import pallas as pl
from jax.experimental.pallas import tpu as pltpu

# ----------------------------- "args" config -------------------------------
TOKEN_DIM = 16          # args.token_dim
EMB = 32                # args.emb
FF = 4 * EMB            # transformer feed-forward width
HEADS = 2
DH = EMB // HEADS
ACTION_SPACE = 6        # args.action_space_size
MAX_ALLY = 8            # args.max_ally_num
MAX_ENEMY = 8           # args.max_enemy_num
MAX_ENTITY = max(MAX_ALLY, MAX_ENEMY)
ALLY_NUM = 5            # args.ally_num  (== task_ally_num)
ENEMY_NUM = 3           # args.enemy_num (== task_enemy_num)

S_E = ACTION_SPACE + MAX_ENTITY      # encoder query length (14)
S_D = ACTION_SPACE + MAX_ENEMY       # decoder query length (14)
S_TOK = S_E + 1                      # encoder tokens incl. hidden token (15)
OUT_Q = ACTION_SPACE + ENEMY_NUM     # map_action_embedding output size (9)
BATCH = 2

AUG = TOKEN_DIM + EMB + 1            # [token | hidden passthrough | bias-one] (49)
LANES = 128
_NEG = -1e30


# --------------------------- shared math helpers ---------------------------
def _layer_norm(x, g, b, eps=1e-5):
    mu = jnp.mean(x, axis=-1, keepdims=True)
    var = jnp.mean((x - mu) ** 2, axis=-1, keepdims=True)
    return (x - mu) * lax.rsqrt(var + eps) * g + b


def _mha_ref(xq, xkv, W, B):
    """Reference multi-head attention. W: (4, EMB, EMB) [q,k,v,o], B: (4, EMB)."""
    q_all = jnp.dot(xq, W[0], preferred_element_type=jnp.float32) + B[0]
    k_all = jnp.dot(xkv, W[1], preferred_element_type=jnp.float32) + B[1]
    v_all = jnp.dot(xkv, W[2], preferred_element_type=jnp.float32) + B[2]
    scale = 1.0 / math.sqrt(DH)
    acc = jnp.zeros((xq.shape[0], EMB), jnp.float32)
    for h in range(HEADS):
        sl = slice(h * DH, (h + 1) * DH)
        qh, kh, vh = q_all[:, sl], k_all[:, sl], v_all[:, sl]
        s = lax.dot_general(qh, kh, (((1,), (1,)), ((), ())),
                            preferred_element_type=jnp.float32) * scale
        s = s - jnp.max(s, axis=-1, keepdims=True)
        p = jnp.exp(s)
        p = p / jnp.sum(p, axis=-1, keepdims=True)
        oh = jnp.dot(p, vh, preferred_element_type=jnp.float32)
        acc = acc + jnp.dot(oh, W[3][sl, :], preferred_element_type=jnp.float32)
    return acc + B[3]


def _np_masks(b):
    """Trace-time additive block-diagonal batch masks (numpy constants)."""
    bid_e = np.repeat(np.arange(b), S_E)
    bid_tok = np.concatenate([bid_e, np.arange(b)])      # hidden row k -> batch k
    bid_d = np.repeat(np.arange(b), S_D)

    def m(qv, kv):
        return np.where(qv[:, None] == kv[None, :], 0.0, _NEG).astype(np.float32)

    return m(bid_tok, bid_tok), m(bid_d, bid_d), m(bid_d, bid_tok)


# ------------------------------- glue (JAX) ---------------------------------
def build_queries(params, inputs, task_ally_num):
    """append_extra_infos for encoder and decoder (random_inputs=False path)."""
    b = inputs.shape[0]
    enc_in = inputs[:, :task_ally_num, :]
    dec_in = inputs[:, task_ally_num:, :]
    enc_q = jnp.broadcast_to(params["encoder_query"], (b, S_E, TOKEN_DIM))
    enc_q = enc_q.at[:, :ALLY_NUM, :].set(enc_in)
    dec_q = jnp.broadcast_to(params["decoder_query"], (b, S_D, TOKEN_DIM))
    dec_q = dec_q.at[:, ACTION_SPACE:ACTION_SPACE + ENEMY_NUM, :].set(dec_in)
    return enc_q, dec_q


def transfermer_forward(params, inputs, hidden_state, task_ally_num=ALLY_NUM):
    b = inputs.shape[0]
    enc_q, dec_q = build_queries(params, inputs, task_ally_num)

    e_rows = b * S_E                      # encoder-query rows (flattened)
    d_rows = b * S_D                      # decoder-query rows (flattened)
    tok_rows = e_rows + b                 # encoder tokens incl. per-batch hidden row
    d_off = -(-tok_rows // 8) * 8         # decoder rows start sublane-aligned
    r_total = d_off + d_rows
    qcols = b * OUT_Q

    # ---- activations: rows = [enc queries ; hidden ; pad ; dec queries] ------
    # columns = [token (16) | hidden passthrough (32) | bias-one (1)]
    hid = hidden_state.reshape(b, EMB)
    x_aug = jnp.zeros((r_total, AUG), jnp.float32)
    x_aug = x_aug.at[0:e_rows, 0:TOKEN_DIM].set(enc_q.reshape(e_rows, TOKEN_DIM))
    x_aug = x_aug.at[0:e_rows, AUG - 1].set(1.0)
    x_aug = x_aug.at[e_rows:tok_rows, TOKEN_DIM:TOKEN_DIM + EMB].set(hid)
    x_aug = x_aug.at[d_off:d_off + d_rows, 0:TOKEN_DIM].set(dec_q.reshape(d_rows, TOKEN_DIM))
    x_aug = x_aug.at[d_off:d_off + d_rows, AUG - 1].set(1.0)
    x_aug = x_aug.astype(jnp.bfloat16)

    # ---- bf16 weight pack: 128-lane-aligned segments --------------------------
    def seg128(w):
        w = jnp.asarray(w, jnp.float32)
        return jnp.pad(w, ((0, AUG - w.shape[0]), (0, LANES - w.shape[1])))

    # augmented embedding weight: [w_tok ; I_EMB ; b_tok]  (49, 32)
    w_aug = jnp.concatenate(
        [params["w_tok"], jnp.eye(EMB, dtype=jnp.float32), params["b_tok"]], axis=0)
    wq = params["w_qkvo"]                                  # (3, 4, E, E) [q,k,v,o]
    segs = [seg128(w_aug)]
    for i in range(3):                                     # per attn block: [Wq|Wk|Wv|Wo]
        segs.append(seg128(jnp.concatenate([wq[i, 0], wq[i, 1], wq[i, 2], wq[i, 3]], axis=1)))
    segs += [seg128(params["w_ff1"][0]), seg128(params["w_ff1"][1])]
    w_main = jnp.concatenate(segs, axis=1).astype(jnp.bfloat16)      # (49, 768)
    w_ff2 = params["w_ff2"].astype(jnp.bfloat16)                     # (2, 128, 32)

    # ---- f32 constant pack: biases, LN params, output head, batch masks ------
    rows, offs = [], {}
    n = 0

    def put(name, arr, align=1):
        nonlocal n
        arr = jnp.asarray(arr, jnp.float32)
        if arr.ndim == 1:
            arr = arr[None, :]
        pad_r = (-n) % align
        if pad_r:
            rows.append(jnp.zeros((pad_r, LANES), jnp.float32))
            n += pad_r
        offs[name] = n
        rows.append(jnp.pad(arr, ((0, 0), (0, LANES - arr.shape[1]))))
        n += arr.shape[0]

    put("b_att", params["b_qkvo"].reshape(3, 4 * EMB))     # per block [bq|bk|bv|bo]
    put("b_ff1", params["b_ff1"])                          # (2, 128)
    put("b_ff2", params["b_ff2"])                          # (2, 32)
    put("ln_g", params["ln_g"])                            # (5, 32)
    put("ln_b", params["ln_b"])                            # (5, 32)
    put("w_act", params["w_act"])                          # (1, 32)
    b_qout = jnp.tile(params["b_act"][0, 0]
                      * jnp.sum(params["w_map"], axis=0, keepdims=True)
                      + params["b_map"], (1, b))           # prefolded (1, b*OUT_Q)
    put("b_qout", b_qout)
    put("w_map", jnp.kron(jnp.eye(b, dtype=jnp.float32), params["w_map"]), align=8)
    m_enc, m_dd, m_dt = _np_masks(b)
    put("m_enc", m_enc, align=8)
    put("m_dd", m_dd, align=8)
    put("m_dt", m_dt, align=8)
    const = jnp.concatenate(rows, axis=0)                  # (~148, 128) f32

    # ------------------------------ kernel -------------------------------------
    def kernel(x_ref, wm_ref, wf2_ref, c_ref, out_ref):
        f32, bf16 = jnp.float32, jnp.bfloat16
        scale = 1.0 / math.sqrt(DH)

        def crow(name, i=0, rows=1, cols=LANES):
            r = offs[name] + i
            return c_ref[r:r + rows, 0:cols]

        def ln(x, i):
            g = crow("ln_g", i, cols=EMB)
            be = crow("ln_b", i, cols=EMB)
            mu = jnp.mean(x, axis=-1, keepdims=True)
            ex2 = jnp.mean(x * x, axis=-1, keepdims=True)          # independent reductions
            var = jnp.maximum(ex2 - mu * mu, 0.0)
            return (x - mu) * lax.rsqrt(var + 1e-5) * g + be

        def attn(xq, xkv, blk, mask, cross):
            seg = LANES * (1 + blk)
            wblk = wm_ref[0:EMB, seg:seg + 4 * EMB]                # bf16 [Wq|Wk|Wv|Wo]
            bias = crow("b_att", blk)                              # f32  [bq|bk|bv|bo]
            if cross:
                # Only Q from the decoder stream, only K/V from the encoder tokens.
                q = jnp.dot(xq.astype(bf16), wblk[:, 0:EMB],
                            preferred_element_type=f32) + bias[:, 0:EMB]
                kv = jnp.dot(xkv.astype(bf16), wblk[:, EMB:3 * EMB],
                             preferred_element_type=f32) + bias[:, EMB:3 * EMB]
                k, v = kv[:, 0:EMB], kv[:, EMB:2 * EMB]
            else:
                qkv = jnp.dot(xq.astype(bf16), wblk[:, 0:3 * EMB],
                              preferred_element_type=f32) + bias[:, 0:3 * EMB]
                q, k, v = qkv[:, 0:EMB], qkv[:, EMB:2 * EMB], qkv[:, 2 * EMB:3 * EMB]
            wo = wblk[:, 3 * EMB:4 * EMB]
            acc = jnp.zeros((xq.shape[0], EMB), f32)
            for h in range(HEADS):
                sl = slice(h * DH, (h + 1) * DH)
                qh, kh, vh = q[:, sl].astype(bf16), k[:, sl].astype(bf16), v[:, sl].astype(bf16)
                s = lax.dot_general(qh, kh, (((1,), (1,)), ((), ())),
                                    preferred_element_type=f32) * scale + mask
                s = s - jnp.max(s, axis=-1, keepdims=True)
                p = jnp.exp(s)
                p = p * pl.reciprocal(jnp.sum(p, axis=-1, keepdims=True), approx=True)
                oh = jnp.dot(p.astype(bf16), vh, preferred_element_type=f32)
                acc = acc + jnp.dot(oh.astype(bf16), wo[sl, :],
                                    preferred_element_type=f32)
            return acc + bias[:, 3 * EMB:4 * EMB]

        def ffn(x, i):
            seg = LANES * (4 + i)
            f = jnp.dot(x.astype(bf16), wm_ref[0:EMB, seg:seg + FF],
                        preferred_element_type=f32) + crow("b_ff1", i)
            f = jnp.maximum(f, 0.0)
            return (jnp.dot(f.astype(bf16), wf2_ref[i], preferred_element_type=f32)
                    + crow("b_ff2", i, cols=EMB))

        # Precomputed block-diagonal batch masks (constants, DMA'd with weights).
        mask_enc = crow("m_enc", rows=tok_rows, cols=tok_rows)
        mask_dd = crow("m_dd", rows=d_rows, cols=d_rows)
        mask_dt = crow("m_dt", rows=d_rows, cols=tok_rows)

        # One fused matmul: token embedding of enc+dec queries, identity
        # pass-through of the hidden rows, bias via the ones-column.
        emb_all = jnp.dot(x_ref[...], wm_ref[:, 0:EMB], preferred_element_type=f32)
        tok = emb_all[0:tok_rows, :]                    # encoder tokens (+ hidden rows)
        emb_d = emb_all[d_off:d_off + d_rows, :]        # embedded decoder queries

        # Encoder block (batch-block-diagonal self-attn + FFN, post-LN).
        x = ln(tok + attn(tok, tok, 0, mask_enc, cross=False), 0)
        tokens = ln(x + ffn(x, 0), 1)

        # Decoder block (self-attn + cross-attn + FFN, post-LN).
        y = ln(emb_d + attn(emb_d, emb_d, 1, mask_dd, cross=False), 2)
        y = ln(y + attn(y, tokens, 2, mask_dt, cross=True), 3)
        outputs = ln(y + ffn(y, 1), 4)                  # (b*S_D, EMB)

        # action_embedding (EMB->1) + map_action_embedding (S_D->OUT_Q), fused
        # across the batch via a block-diagonal weight; biases prefolded.
        w_act = crow("w_act", cols=EMB)
        w_map = crow("w_map", rows=d_rows, cols=qcols)
        b_qo = crow("b_qout", cols=qcols)
        q_colT = lax.dot_general(w_act, outputs, (((1,), (1,)), ((), ())),
                                 preferred_element_type=f32)        # (1, b*S_D)
        q_row = jnp.dot(q_colT, w_map, preferred_element_type=f32) + b_qo

        out_ref[...] = jnp.zeros((1 + b, EMB), f32)
        out_ref[0:1, 0:qcols] = q_row                   # row 0: flattened q
        out_ref[1:1 + b, :] = tokens[e_rows:tok_rows, :]  # rows 1..b: hidden h

    # ----------------------------- pallas_call ---------------------------------
    def _full(shape):
        nd = len(shape)
        return pl.BlockSpec(shape, lambda *_, nd=nd: (0,) * nd)

    args = [x_aug, w_main, w_ff2, const]
    out = pl.pallas_call(
        kernel,
        out_shape=jax.ShapeDtypeStruct((1 + b, EMB), jnp.float32),
        grid_spec=pltpu.PrefetchScalarGridSpec(
            num_scalar_prefetch=0,
            grid=(1,),
            in_specs=[_full(a.shape) for a in args],
            out_specs=_full((1 + b, EMB)),
        ),
        compiler_params=pltpu.CompilerParams(dimension_semantics=("arbitrary",)),
    )(*args)

    q = out[0, 0:qcols].reshape(b, OUT_Q)   # matches q.reshape(-1, S_D) -> Linear -> (b, OUT_Q)
    h = out[1:1 + b, :].reshape(b, 1, EMB)  # h = tokens[:, -1:, :]
    return q, h


# --------------------------- pure-JAX reference ------------------------------
def ref_forward(p, enc_q, dec_q, hid):
    def one(xe, xd, h0):
        emb_e = xe @ p["w_tok"] + p["b_tok"]
        emb_d = xd @ p["w_tok"] + p["b_tok"]
        tok = jnp.concatenate([emb_e, h0], axis=0)
        W, Bq = p["w_qkvo"], p["b_qkvo"]
        a = _mha_ref(tok, tok, W[0], Bq[0])
        x = _layer_norm(tok + a, p["ln_g"][0], p["ln_b"][0])
        f = jnp.maximum(x @ p["w_ff1"][0] + p["b_ff1"][0], 0.0)
        f = f @ p["w_ff2"][0] + p["b_ff2"][0]
        tokens = _layer_norm(x + f, p["ln_g"][1], p["ln_b"][1])
        a = _mha_ref(emb_d, emb_d, W[1], Bq[1])
        y = _layer_norm(emb_d + a, p["ln_g"][2], p["ln_b"][2])
        a = _mha_ref(y, tokens, W[2], Bq[2])
        y = _layer_norm(y + a, p["ln_g"][3], p["ln_b"][3])
        f = jnp.maximum(y @ p["w_ff1"][1] + p["b_ff1"][1], 0.0)
        f = f @ p["w_ff2"][1] + p["b_ff2"][1]
        outputs = _layer_norm(y + f, p["ln_g"][4], p["ln_b"][4])
        q_col = jnp.sum(outputs * p["w_act"], axis=-1, keepdims=True) + p["b_act"]
        q_row = jnp.sum(q_col * p["w_map"], axis=0, keepdims=True) + p["b_map"]
        return q_row[0], tokens[S_E:S_TOK, :]
    return jax.vmap(one)(enc_q, dec_q, hid)


# ----------------------------------- main ------------------------------------
if __name__ == "__main__":
    key = jax.random.PRNGKey(0)
    keys = jax.random.split(key, 16)

    def u(k, shape, scale=0.1):
        return jax.random.uniform(k, shape, jnp.float32, -scale, scale)

    params = {
        # torch.rand queries (uniform [0,1)), random_encoder_inputs_zero=False
        "encoder_query": jax.random.uniform(keys[0], (1, S_E, TOKEN_DIM), jnp.float32),
        "decoder_query": jax.random.uniform(keys[1], (1, S_D, TOKEN_DIM), jnp.float32),
        # transformer weights
        "w_tok": u(keys[2], (TOKEN_DIM, EMB)),
        "b_tok": u(keys[3], (1, EMB)),
        "w_qkvo": u(keys[4], (3, 4, EMB, EMB)),   # [enc, dec-self, dec-cross] x [q,k,v,o]
        "b_qkvo": u(keys[5], (3, 4, EMB)),
        "w_ff1": u(keys[6], (2, EMB, FF)),
        "b_ff1": u(keys[7], (2, FF)),
        "w_ff2": u(keys[8], (2, FF, EMB)),
        "b_ff2": u(keys[9], (2, EMB)),
        "ln_g": jnp.ones((5, EMB), jnp.float32),
        "ln_b": jnp.zeros((5, EMB), jnp.float32),
        # action_embedding: Linear(emb, 1)
        "w_act": u(keys[10], (1, EMB)),
        "b_act": u(keys[11], (1, 1)),
        # map_action_embedding: Linear(action_space+max_enemy, action_space+enemy)
        "w_map": u(keys[12], (S_D, OUT_Q)),
        "b_map": u(keys[13], (1, OUT_Q)),
    }

    # inputs: (b, t, e) with t = ally_num + enemy_num entity tokens
    inputs = jax.random.uniform(keys[14], (BATCH, ALLY_NUM + ENEMY_NUM, TOKEN_DIM),
                                jnp.float32)
    # init_hidden(): zeros(1, emb), expanded per batch element
    hidden_state = jnp.zeros((BATCH, 1, EMB), jnp.float32)

    fwd = jax.jit(transfermer_forward, static_argnums=(3,))
    q, h = fwd(params, inputs, hidden_state, ALLY_NUM)
    q = jax.block_until_ready(q)
    h = jax.block_until_ready(h)

    assert q.shape == (BATCH, OUT_Q), q.shape
    assert h.shape == (BATCH, 1, EMB), h.shape

    # correctness check against pure-JAX f32 reference (kernel uses bf16 matmuls)
    enc_q, dec_q = build_queries(params, inputs, ALLY_NUM)
    q_ref, h_ref = ref_forward(params, enc_q, dec_q, hidden_state)
    np.testing.assert_allclose(np.asarray(q), np.asarray(q_ref), rtol=2e-2, atol=2e-2)
    np.testing.assert_allclose(np.asarray(h), np.asarray(h_ref), rtol=2e-2, atol=2e-2)

    print("KERNEL_OK")
</pallas_src>

<mosaic_0001>
module attributes {stable_mosaic.version = 11 : i64} {
  func.func @kernel(%arg0: i32, %arg1: memref<60x49xbf16, #tpu.memory_space<vmem>>, %arg2: memref<49x768xbf16, #tpu.memory_space<vmem>>, %arg3: memref<2x128x32xbf16, #tpu.memory_space<vmem>>, %arg4: memref<148x128xf32, #tpu.memory_space<vmem>>, %arg5: memref<3x32xf32, #tpu.memory_space<vmem>>) attributes {dimension_semantics = [#tpu.dimension_semantics<arbitrary>], iteration_bounds = array<i64: 1>, scalar_prefetch = 0 : i64, scratch_operands = 0 : i64, tpu.core_type = #tpu.core_type<tc>, window_params = [{pipeline_mode = #tpu.pipeline_mode<synchronous>, transform_indices = @transform_0, window_bounds = array<i64: 60, 49>}, {pipeline_mode = #tpu.pipeline_mode<synchronous>, transform_indices = @transform_1, window_bounds = array<i64: 49, 768>}, {pipeline_mode = #tpu.pipeline_mode<synchronous>, transform_indices = @transform_2, window_bounds = array<i64: 2, 128, 32>}, {pipeline_mode = #tpu.pipeline_mode<synchronous>, transform_indices = @transform_3, window_bounds = array<i64: 148, 128>}, {pipeline_mode = #tpu.pipeline_mode<synchronous>, transform_indices = @transform_4, window_bounds = array<i64: 3, 32>}]} {
    %c56 = arith.constant 56 : index
    %c0 = arith.constant 0 : index
    %0 = vector.load %arg4[%c56, %c0] : memref<148x128xf32, #tpu.memory_space<vmem>>, vector<30x30xf32>
    %c88 = arith.constant 88 : index
    %c0_0 = arith.constant 0 : index
    %1 = vector.load %arg4[%c88, %c0_0] : memref<148x128xf32, #tpu.memory_space<vmem>>, vector<28x28xf32>
    %c120 = arith.constant 120 : index
    %c0_1 = arith.constant 0 : index
    %2 = vector.load %arg4[%c120, %c0_1] : memref<148x128xf32, #tpu.memory_space<vmem>>, vector<28x30xf32>
    %c0_2 = arith.constant 0 : index
    %c0_3 = arith.constant 0 : index
    %3 = vector.load %arg1[%c0_2, %c0_3] : memref<60x49xbf16, #tpu.memory_space<vmem>>, vector<60x49xbf16>
    %c0_4 = arith.constant 0 : index
    %c0_5 = arith.constant 0 : index
    %4 = vector.load %arg2[%c0_4, %c0_5] : memref<49x768xbf16, #tpu.memory_space<vmem>>, vector<49x32xbf16>
    %cst = arith.constant dense<0.000000e+00> : vector<60x32xf32>
    %5 = tpu.matmul %3, %4, %cst {dimension_numbers = #tpu.dot_dimension_numbers<[1], [0], [0], [1], [0, 0, 1, 1], [], []>} : vector<60x49xbf16>, vector<49x32xbf16>, vector<60x32xf32> -> vector<60x32xf32>
    %6 = vector.extract_strided_slice %5 {offsets = [0, 0], sizes = [30, 32], strides = [1, 1]} : vector<60x32xf32> to vector<30x32xf32>
    %7 = vector.extract_strided_slice %5 {offsets = [32, 0], sizes = [28, 32], strides = [1, 1]} : vector<60x32xf32> to vector<28x32xf32>
    %c0_6 = arith.constant 0 : index
    %c128 = arith.constant 128 : index
    %8 = vector.load %arg2[%c0_6, %c128] : memref<49x768xbf16, #tpu.memory_space<vmem>>, vector<32x128xbf16>
    %c0_7 = arith.constant 0 : index
    %c0_8 = arith.constant 0 : index
    %9 = vector.load %arg4[%c0_7, %c0_8] : memref<148x128xf32, #tpu.memory_space<vmem>>, vector<1x128xf32>
    %10 = arith.truncf %6 : vector<30x32xf32> to vector<30x32xbf16>
    %11 = vector.extract_strided_slice %8 {offsets = [0, 0], sizes = [32, 96], strides = [1, 1]} : vector<32x128xbf16> to vector<32x96xbf16>
    %cst_9 = arith.constant dense<0.000000e+00> : vector<30x96xf32>
    %12 = tpu.matmul %10, %11, %cst_9 {dimension_numbers = #tpu.dot_dimension_numbers<[1], [0], [0], [1], [0, 0, 1, 1], [], []>} : vector<30x32xbf16>, vector<32x96xbf16>, vector<30x96xf32> -> vector<30x96xf32>
    %13 = vector.extract_strided_slice %9 {offsets = [0, 0], sizes = [1, 96], strides = [1, 1]} : vector<1x128xf32> to vector<1x96xf32>
    %14 = vector.broadcast %13 : vector<1x96xf32> to vector<30x96xf32>
    %15 = arith.addf %12, %14 : vector<30x96xf32>
    %16 = vector.extract_strided_slice %15 {offsets = [0, 0], sizes = [30, 32], strides = [1, 1]} : vector<30x96xf32> to vector<30x32xf32>
    %17 = vector.extract_strided_slice %15 {offsets = [0, 32], sizes = [30, 32], strides = [1, 1]} : vector<30x96xf32> to vector<30x32xf32>
    %18 = vector.extract_strided_slice %15 {offsets = [0, 64], sizes = [30, 32], strides = [1, 1]} : vector<30x96xf32> to vector<30x32xf32>
    %19 = vector.extract_strided_slice %8 {offsets = [0, 96], sizes = [32, 32], strides = [1, 1]} : vector<32x128xbf16> to vector<32x32xbf16>
    %cst_10 = arith.constant 0.000000e+00 : f32
    %20 = vector.broadcast %cst_10 : f32 to vector<30x32xf32>
    %21 = vector.extract_strided_slice %16 {offsets = [0, 0], sizes = [30, 16], strides = [1, 1]} : vector<30x32xf32> to vector<30x16xf32>
    %22 = arith.truncf %21 : vector<30x16xf32> to vector<30x16xbf16>
    %23 = vector.extract_strided_slice %17 {offsets = [0, 0], sizes = [30, 16], strides = [1, 1]} : vector<30x32xf32> to vector<30x16xf32>
    %24 = arith.truncf %23 : vector<30x16xf32> to vector<30x16xbf16>
    %25 = vector.extract_strided_slice %18 {offsets = [0, 0], sizes = [30, 16], strides = [1, 1]} : vector<30x32xf32> to vector<30x16xf32>
    %26 = arith.truncf %25 : vector<30x16xf32> to vector<30x16xbf16>
    %cst_11 = arith.constant dense<0.000000e+00> : vector<30x30xf32>
    %27 = tpu.matmul %22, %24, %cst_11 {dimension_numbers = #tpu.dot_dimension_numbers<[1], [1], [0], [0], [0, 0, 1, 0], [], []>} : vector<30x16xbf16>, vector<30x16xbf16>, vector<30x30xf32> -> vector<30x30xf32>
    %cst_12 = arith.constant 2.500000e-01 : f32
    %28 = vector.broadcast %cst_12 : f32 to vector<30x30xf32>
    %29 = arith.mulf %27, %28 : vector<30x30xf32>
    %30 = arith.addf %29, %0 : vector<30x30xf32>
    %cst_13 = arith.constant dense<0xFF800000> : vector<30xf32>
    %31 = vector.multi_reduction <maximumf>, %30, %cst_13 [1] : vector<30x30xf32> to vector<30xf32>
    %32 = vector.shape_cast %31 : vector<30xf32> to vector<30x1xf32>
    %33 = vector.broadcast %32 : vector<30x1xf32> to vector<30x30xf32>
    %34 = arith.subf %30, %33 : vector<30x30xf32>
    %35 = math.exp %34 : vector<30x30xf32>
    %cst_14 = arith.constant dense<0.000000e+00> : vector<30xf32>
    %36 = vector.multi_reduction <add>, %35, %cst_14 [1] : vector<30x30xf32> to vector<30xf32>
    %37 = vector.shape_cast %36 : vector<30xf32> to vector<30x1xf32>
    %38 = tpu.reciprocal %37 {approx = true} : vector<30x1xf32> -> vector<30x1xf32>
    %39 = vector.broadcast %38 : vector<30x1xf32> to vector<30x30xf32>
    %40 = arith.mulf %35, %39 : vector<30x30xf32>
    %41 = arith.truncf %40 : vector<30x30xf32> to vector<30x30xbf16>
    %cst_15 = arith.constant dense<0.000000e+00> : vector<30x16xf32>
    %42 = tpu.matmul %41, %26, %cst_15 {dimension_numbers = #tpu.dot_dimension_numbers<[1], [0], [0], [1], [0, 0, 1, 1], [], []>} : vector<30x30xbf16>, vector<30x16xbf16>, vector<30x16xf32> -> vector<30x16xf32>
    %43 = arith.truncf %42 : vector<30x16xf32> to vector<30x16xbf16>
    %44 = vector.extract_strided_slice %19 {offsets = [0, 0], sizes = [16, 32], strides = [1, 1]} : vector<32x32xbf16> to vector<16x32xbf16>
    %cst_16 = arith.constant dense<0.000000e+00> : vector<30x32xf32>
    %45 = tpu.matmul %43, %44, %cst_16 {dimension_numbers = #tpu.dot_dimension_numbers<[1], [0], [0], [1], [0, 0, 1, 1], [], []>} : vector<30x16xbf16>, vector<16x32xbf16>, vector<30x32xf32> -> vector<30x32xf32>
    %46 = arith.addf %20, %45 : vector<30x32xf32>
    %47 = vector.extract_strided_slice %16 {offsets = [0, 16], sizes = [30, 16], strides = [1, 1]} : vector<30x32xf32> to vector<30x16xf32>
    %48 = arith.truncf %47 : vector<30x16xf32> to vector<30x16xbf16>
    %49 = vector.extract_strided_slice %17 {offsets = [0, 16], sizes = [30, 16], strides = [1, 1]} : vector<30x32xf32> to vector<30x16xf32>
    %50 = arith.truncf %49 : vector<30x16xf32> to vector<30x16xbf16>
    %51 = vector.extract_strided_slice %18 {offsets = [0, 16], sizes = [30, 16], strides = [1, 1]} : vector<30x32xf32> to vector<30x16xf32>
    %52 = arith.truncf %51 : vector<30x16xf32> to vector<30x16xbf16>
    %cst_17 = arith.constant dense<0.000000e+00> : vector<30x30xf32>
    %53 = tpu.matmul %48, %50, %cst_17 {dimension_numbers = #tpu.dot_dimension_numbers<[1], [1], [0], [0], [0, 0, 1, 0], [], []>} : vector<30x16xbf16>, vector<30x16xbf16>, vector<30x30xf32> -> vector<30x30xf32>
    %cst_18 = arith.constant 2.500000e-01 : f32
    %54 = vector.broadcast %cst_18 : f32 to vector<30x30xf32>
    %55 = arith.mulf %53, %54 : vector<30x30xf32>
    %56 = arith.addf %55, %0 : vector<30x30xf32>
    %cst_19 = arith.constant dense<0xFF800000> : vector<30xf32>
    %57 = vector.multi_reduction <maximumf>, %56, %cst_19 [1] : vector<30x30xf32> to vector<30xf32>
    %58 = vector.shape_cast %57 : vector<30xf32> to vector<30x1xf32>
    %59 = vector.broadcast %58 : vector<30x1xf32> to vector<30x30xf32>
    %60 = arith.subf %56, %59 : vector<30x30xf32>
    %61 = math.exp %60 : vector<30x30xf32>
    %cst_20 = arith.constant dense<0.000000e+00> : vector<30xf32>
    %62 = vector.multi_reduction <add>, %61, %cst_20 [1] : vector<30x30xf32> to vector<30xf32>
    %63 = vector.shape_cast %62 : vector<30xf32> to vector<30x1xf32>
    %64 = tpu.reciprocal %63 {approx = true} : vector<30x1xf32> -> vector<30x1xf32>
    %65 = vector.broadcast %64 : vector<30x1xf32> to vector<30x30xf32>
    %66 = arith.mulf %61, %65 : vector<30x30xf32>
    %67 = arith.truncf %66 : vector<30x30xf32> to vector<30x30xbf16>
    %cst_21 = arith.constant dense<0.000000e+00> : vector<30x16xf32>
    %68 = tpu.matmul %67, %52, %cst_21 {dimension_numbers = #tpu.dot_dimension_numbers<[1], [0], [0], [1], [0, 0, 1, 1], [], []>} : vector<30x30xbf16>, vector<30x16xbf16>, vector<30x16xf32> -> vector<30x16xf32>
    %69 = arith.truncf %68 : vector<30x16xf32> to vector<30x16xbf16>
    %70 = vector.extract_strided_slice %19 {offsets = [16, 0], sizes = [16, 32], strides = [1, 1]} : vector<32x32xbf16> to vector<16x32xbf16>
    %cst_22 = arith.constant dense<0.000000e+00> : vector<30x32xf32>
    %71 = tpu.matmul %69, %70, %cst_22 {dimension_numbers = #tpu.dot_dimension_numbers<[1], [0], [0], [1], [0, 0, 1, 1], [], []>} : vector<30x16xbf16>, vector<16x32xbf16>, vector<30x32xf32> -> vector<30x32xf32>
    %72 = arith.addf %46, %71 : vector<30x32xf32>
    %73 = vector.extract_strided_slice %9 {offsets = [0, 96], sizes = [1, 32], strides = [1, 1]} : vector<1x128xf32> to vector<1x32xf32>
    %74 = vector.broadcast %73 : vector<1x32xf32> to vector<30x32xf32>
    %75 = arith.addf %72, %74 : vector<30x32xf32>
    %76 = arith.addf %6, %75 : vector<30x32xf32>
    %c7 = arith.constant 7 : index
    %c0_23 = arith.constant 0 : index
    %77 = vector.load %arg4[%c7, %c0_23] : memref<148x128xf32, #tpu.memory_space<vmem>>, vector<1x32xf32>
    %c12 = arith.constant 12 : index
    %c0_24 = arith.constant 0 : index
    %78 = vector.load %arg4[%c12, %c0_24] : memref<148x128xf32, #tpu.memory_space<vmem>>, vector<1x32xf32>
    %cst_25 = arith.constant dense<0.000000e+00> : vector<30xf32>
    %79 = vector.multi_reduction <add>, %76, %cst_25 [1] : vector<30x32xf32> to vector<30xf32>
    %80 = vector.shape_cast %79 : vector<30xf32> to vector<30x1xf32>
    %cst_26 = arith.constant 3.200000e+01 : f32
    %81 = vector.broadcast %cst_26 : f32 to vector<30x1xf32>
    %82 = arith.divf %80, %81 : vector<30x1xf32>
    %83 = arith.mulf %76, %76 : vector<30x32xf32>
    %cst_27 = arith.constant dense<0.000000e+00> : vector<30xf32>
    %84 = vector.multi_reduction <add>, %83, %cst_27 [1] : vector<30x32xf32> to vector<30xf32>
    %85 = vector.shape_cast %84 : vector<30xf32> to vector<30x1xf32>
    %cst_28 = arith.constant 3.200000e+01 : f32
    %86 = vector.broadcast %cst_28 : f32 to vector<30x1xf32>
    %87 = arith.divf %85, %86 : vector<30x1xf32>
    %88 = arith.mulf %82, %82 : vector<30x1xf32>
    %89 = arith.subf %87, %88 : vector<30x1xf32>
    %cst_29 = arith.constant 0.000000e+00 : f32
    %90 = vector.broadcast %cst_29 : f32 to vector<30x1xf32>
    %91 = arith.maximumf %89, %90 : vector<30x1xf32>
    %92 = vector.broadcast %82 : vector<30x1xf32> to vector<30x32xf32>
    %93 = arith.subf %76, %92 : vector<30x32xf32>
    %cst_30 = arith.constant 9.99999974E-6 : f32
    %94 = vector.broadcast %cst_30 : f32 to vector<30x1xf32>
    %95 = arith.addf %91, %94 : vector<30x1xf32>
    %96 = math.rsqrt %95 : vector<30x1xf32>
    %97 = vector.broadcast %96 : vector<30x1xf32> to vector<30x32xf32>
    %98 = arith.mulf %93, %97 : vector<30x32xf32>
    %99 = vector.broadcast %77 : vector<1x32xf32> to vector<30x32xf32>
    %100 = arith.mulf %98, %99 : vector<30x32xf32>
    %101 = vector.broadcast %78 : vector<1x32xf32> to vector<30x32xf32>
    %102 = arith.addf %100, %101 : vector<30x32xf32>
    %103 = arith.truncf %102 : vector<30x32xf32> to vector<30x32xbf16>
    %c0_31 = arith.constant 0 : index
    %c512 = arith.constant 512 : index
    %104 = vector.load %arg2[%c0_31, %c512] : memref<49x768xbf16, #tpu.memory_space<vmem>>, vector<32x128xbf16>
    %cst_32 = arith.constant dense<0.000000e+00> : vector<30x128xf32>
    %105 = tpu.matmul %103, %104, %cst_32 {dimension_numbers = #tpu.dot_dimension_numbers<[1], [0], [0], [1], [0, 0, 1, 1], [], []>} : vector<30x32xbf16>, vector<32x128xbf16>, vector<30x128xf32> -> vector<30x128xf32>
    %c3 = arith.constant 3 : index
    %c0_33 = arith.constant 0 : index
    %106 = vector.load %arg4[%c3, %c0_33] : memref<148x128xf32, #tpu.memory_space<vmem>>, vector<1x128xf32>
    %107 = vector.broadcast %106 : vector<1x128xf32> to vector<30x128xf32>
    %108 = arith.addf %105, %107 : vector<30x128xf32>
    %cst_34 = arith.constant 0.000000e+00 : f32
    %109 = vector.broadcast %cst_34 : f32 to vector<30x128xf32>
    %110 = arith.maximumf %108, %109 : vector<30x128xf32>
    %111 = arith.truncf %110 : vector<30x128xf32> to vector<30x128xbf16>
    %c0_35 = arith.constant 0 : index
    %c0_36 = arith.constant 0 : index
    %c0_37 = arith.constant 0 : index
    %112 = vector.load %arg3[%c0_35, %c0_36, %c0_37] : memref<2x128x32xbf16, #tpu.memory_space<vmem>>, vector<1x128x32xbf16>
    %113 = vector.shape_cast %112 : vector<1x128x32xbf16> to vector<128x32xbf16>
    %cst_38 = arith.constant dense<0.000000e+00> : vector<30x32xf32>
    %114 = tpu.matmul %111, %113, %cst_38 {dimension_numbers = #tpu.dot_dimension_numbers<[1], [0], [0], [1], [0, 0, 1, 1], [], []>} : vector<30x128xbf16>, vector<128x32xbf16>, vector<30x32xf32> -> vector<30x32xf32>
    %c5 = arith.constant 5 : index
    %c0_39 = arith.constant 0 : index
    %115 = vector.load %arg4[%c5, %c0_39] : memref<148x128xf32, #tpu.memory_space<vmem>>, vector<1x32xf32>
    %116 = vector.broadcast %115 : vector<1x32xf32> to vector<30x32xf32>
    %117 = arith.addf %114, %116 : vector<30x32xf32>
    %118 = arith.addf %102, %117 : vector<30x32xf32>
    %c8 = arith.constant 8 : index
    %c0_40 = arith.constant 0 : index
    %119 = vector.load %arg4[%c8, %c0_40] : memref<148x128xf32, #tpu.memory_space<vmem>>, vector<1x32xf32>
    %c13 = arith.constant 13 : index
    %c0_41 = arith.constant 0 : index
    %120 = vector.load %arg4[%c13, %c0_41] : memref<148x128xf32, #tpu.memory_space<vmem>>, vector<1x32xf32>
    %cst_42 = arith.constant dense<0.000000e+00> : vector<30xf32>
    %121 = vector.multi_reduction <add>, %118, %cst_42 [1] : vector<30x32xf32> to vector<30xf32>
    %122 = vector.shape_cast %121 : vector<30xf32> to vector<30x1xf32>
    %cst_43 = arith.constant 3.200000e+01 : f32
    %123 = vector.broadcast %cst_43 : f32 to vector<30x1xf32>
    %124 = arith.divf %122, %123 : vector<30x1xf32>
    %125 = arith.mulf %118, %118 : vector<30x32xf32>
    %cst_44 = arith.constant dense<0.000000e+00> : vector<30xf32>
    %126 = vector.multi_reduction <add>, %125, %cst_44 [1] : vector<30x32xf32> to vector<30xf32>
    %127 = vector.shape_cast %126 : vector<30xf32> to vector<30x1xf32>
    %cst_45 = arith.constant 3.200000e+01 : f32
    %128 = vector.broadcast %cst_45 : f32 to vector<30x1xf32>
    %129 = arith.divf %127, %128 : vector<30x1xf32>
    %130 = arith.mulf %124, %124 : vector<30x1xf32>
    %131 = arith.subf %129, %130 : vector<30x1xf32>
    %cst_46 = arith.constant 0.000000e+00 : f32
    %132 = vector.broadcast %cst_46 : f32 to vector<30x1xf32>
    %133 = arith.maximumf %131, %132 : vector<30x1xf32>
    %134 = vector.broadcast %124 : vector<30x1xf32> to vector<30x32xf32>
    %135 = arith.subf %118, %134 : vector<30x32xf32>
    %cst_47 = arith.constant 9.99999974E-6 : f32
    %136 = vector.broadcast %cst_47 : f32 to vector<30x1xf32>
    %137 = arith.addf %133, %136 : vector<30x1xf32>
    %138 = math.rsqrt %137 : vector<30x1xf32>
    %139 = vector.broadcast %138 : vector<30x1xf32> to vector<30x32xf32>
    %140 = arith.mulf %135, %139 : vector<30x32xf32>
    %141 = vector.broadcast %119 : vector<1x32xf32> to vector<30x32xf32>
    %142 = arith.mulf %140, %141 : vector<30x32xf32>
    %143 = vector.broadcast %120 : vector<1x32xf32> to vector<30x32xf32>
    %144 = arith.addf %142, %143 : vector<30x32xf32>
    %c0_48 = arith.constant 0 : index
    %c256 = arith.constant 256 : index
    %145 = vector.load %arg2[%c0_48, %c256] : memref<49x768xbf16, #tpu.memory_space<vmem>>, vector<32x128xbf16>
    %c1 = arith.constant 1 : index
    %c0_49 = arith.constant 0 : index
    %146 = vector.load %arg4[%c1, %c0_49] : memref<148x128xf32, #tpu.memory_space<vmem>>, vector<1x128xf32>
    %147 = arith.truncf %7 : vector<28x32xf32> to vector<28x32xbf16>
    %148 = vector.extract_strided_slice %145 {offsets = [0, 0], sizes = [32, 96], strides = [1, 1]} : vector<32x128xbf16> to vector<32x96xbf16>
    %cst_50 = arith.constant dense<0.000000e+00> : vector<28x96xf32>
    %149 = tpu.matmul %147, %148, %cst_50 {dimension_numbers = #tpu.dot_dimension_numbers<[1], [0], [0], [1], [0, 0, 1, 1], [], []>} : vector<28x32xbf16>, vector<32x96xbf16>, vector<28x96xf32> -> vector<28x96xf32>
    %150 = vector.extract_strided_slice %146 {offsets = [0, 0], sizes = [1, 96], strides = [1, 1]} : vector<1x128xf32> to vector<1x96xf32>
    %151 = vector.broadcast %150 : vector<1x96xf32> to vector<28x96xf32>
    %152 = arith.addf %149, %151 : vector<28x96xf32>
    %153 = vector.extract_strided_slice %152 {offsets = [0, 0], sizes = [28, 32], strides = [1, 1]} : vector<28x96xf32> to vector<28x32xf32>
    %154 = vector.extract_strided_slice %152 {offsets = [0, 32], sizes = [28, 32], strides = [1, 1]} : vector<28x96xf32> to vector<28x32xf32>
    %155 = vector.extract_strided_slice %152 {offsets = [0, 64], sizes = [28, 32], strides = [1, 1]} : vector<28x96xf32> to vector<28x32xf32>
    %156 = vector.extract_strided_slice %145 {offsets = [0, 96], sizes = [32, 32], strides = [1, 1]} : vector<32x128xbf16> to vector<32x32xbf16>
    %cst_51 = arith.constant 0.000000e+00 : f32
    %157 = vector.broadcast %cst_51 : f32 to vector<28x32xf32>
    %158 = vector.extract_strided_slice %153 {offsets = [0, 0], sizes = [28, 16], strides = [1, 1]} : vector<28x32xf32> to vector<28x16xf32>
    %159 = arith.truncf %158 : vector<28x16xf32> to vector<28x16xbf16>
    %160 = vector.extract_strided_slice %154 {offsets = [0, 0], sizes = [28, 16], strides = [1, 1]} : vector<28x32xf32> to vector<28x16xf32>
    %161 = arith.truncf %160 : vector<28x16xf32> to vector<28x16xbf16>
    %162 = vector.extract_strided_slice %155 {offsets = [0, 0], sizes = [28, 16], strides = [1, 1]} : vector<28x32xf32> to vector<28x16xf32>
    %163 = arith.truncf %162 : vector<28x16xf32> to vector<28x16xbf16>
    %cst_52 = arith.constant dense<0.000000e+00> : vector<28x28xf32>
    %164 = tpu.matmul %159, %161, %cst_52 {dimension_numbers = #tpu.dot_dimension_numbers<[1], [1], [0], [0], [0, 0, 1, 0], [], []>} : vector<28x16xbf16>, vector<28x16xbf16>, vector<28x28xf32> -> vector<28x28xf32>
    %cst_53 = arith.constant 2.500000e-01 : f32
    %165 = vector.broadcast %cst_53 : f32 to vector<28x28xf32>
    %166 = arith.mulf %164, %165 : vector<28x28xf32>
    %167 = arith.addf %166, %1 : vector<28x28xf32>
    %cst_54 = arith.constant dense<0xFF800000> : vector<28xf32>
    %168 = vector.multi_reduction <maximumf>, %167, %cst_54 [1] : vector<28x28xf32> to vector<28xf32>
    %169 = vector.shape_cast %168 : vector<28xf32> to vector<28x1xf32>
    %170 = vector.broadcast %169 : vector<28x1xf32> to vector<28x28xf32>
    %171 = arith.subf %167, %170 : vector<28x28xf32>
    %172 = math.exp %171 : vector<28x28xf32>
    %cst_55 = arith.constant dense<0.000000e+00> : vector<28xf32>
    %173 = vector.multi_reduction <add>, %172, %cst_55 [1] : vector<28x28xf32> to vector<28xf32>
    %174 = vector.shape_cast %173 : vector<28xf32> to vector<28x1xf32>
    %175 = tpu.reciprocal %174 {approx = true} : vector<28x1xf32> -> vector<28x1xf32>
    %176 = vector.broadcast %175 : vector<28x1xf32> to vector<28x28xf32>
    %177 = arith.mulf %172, %176 : vector<28x28xf32>
    %178 = arith.truncf %177 : vector<28x28xf32> to vector<28x28xbf16>
    %cst_56 = arith.constant dense<0.000000e+00> : vector<28x16xf32>
    %179 = tpu.matmul %178, %163, %cst_56 {dimension_numbers = #tpu.dot_dimension_numbers<[1], [0], [0], [1], [0, 0, 1, 1], [], []>} : vector<28x28xbf16>, vector<28x16xbf16>, vector<28x16xf32> -> vector<28x16xf32>
    %180 = arith.truncf %179 : vector<28x16xf32> to vector<28x16xbf16>
    %181 = vector.extract_strided_slice %156 {offsets = [0, 0], sizes = [16, 32], strides = [1, 1]} : vector<32x32xbf16> to vector<16x32xbf16>
    %cst_57 = arith.constant dense<0.000000e+00> : vector<28x32xf32>
    %182 = tpu.matmul %180, %181, %cst_57 {dimension_numbers = #tpu.dot_dimension_numbers<[1], [0], [0], [1], [0, 0, 1, 1], [], []>} : vector<28x16xbf16>, vector<16x32xbf16>, vector<28x32xf32> -> vector<28x32xf32>
    %183 = arith.addf %157, %182 : vector<28x32xf32>
    %184 = vector.extract_strided_slice %153 {offsets = [0, 16], sizes = [28, 16], strides = [1, 1]} : vector<28x32xf32> to vector<28x16xf32>
    %185 = arith.truncf %184 : vector<28x16xf32> to vector<28x16xbf16>
    %186 = vector.extract_strided_slice %154 {offsets = [0, 16], sizes = [28, 16], strides = [1, 1]} : vector<28x32xf32> to vector<28x16xf32>
    %187 = arith.truncf %186 : vector<28x16xf32> to vector<28x16xbf16>
    %188 = vector.extract_strided_slice %155 {offsets = [0, 16], sizes = [28, 16], strides = [1, 1]} : vector<28x32xf32> to vector<28x16xf32>
    %189 = arith.truncf %188 : vector<28x16xf32> to vector<28x16xbf16>
    %cst_58 = arith.constant dense<0.000000e+00> : vector<28x28xf32>
    %190 = tpu.matmul %185, %187, %cst_58 {dimension_numbers = #tpu.dot_dimension_numbers<[1], [1], [0], [0], [0, 0, 1, 0], [], []>} : vector<28x16xbf16>, vector<28x16xbf16>, vector<28x28xf32> -> vector<28x28xf32>
    %cst_59 = arith.constant 2.500000e-01 : f32
    %191 = vector.broadcast %cst_59 : f32 to vector<28x28xf32>
    %192 = arith.mulf %190, %191 : vector<28x28xf32>
    %193 = arith.addf %192, %1 : vector<28x28xf32>
    %cst_60 = arith.constant dense<0xFF800000> : vector<28xf32>
    %194 = vector.multi_reduction <maximumf>, %193, %cst_60 [1] : vector<28x28xf32> to vector<28xf32>
    %195 = vector.shape_cast %194 : vector<28xf32> to vector<28x1xf32>
    %196 = vector.broadcast %195 : vector<28x1xf32> to vector<28x28xf32>
    %197 = arith.subf %193, %196 : vector<28x28xf32>
    %198 = math.exp %197 : vector<28x28xf32>
    %cst_61 = arith.constant dense<0.000000e+00> : vector<28xf32>
    %199 = vector.multi_reduction <add>, %198, %cst_61 [1] : vector<28x28xf32> to vector<28xf32>
    %200 = vector.shape_cast %199 : vector<28xf32> to vector<28x1xf32>
    %201 = tpu.reciprocal %200 {approx = true} : vector<28x1xf32> -> vector<28x1xf32>
    %202 = vector.broadcast %201 : vector<28x1xf32> to vector<28x28xf32>
    %203 = arith.mulf %198, %202 : vector<28x28xf32>
    %204 = arith.truncf %203 : vector<28x28xf32> to vector<28x28xbf16>
    %cst_62 = arith.constant dense<0.000000e+00> : vector<28x16xf32>
    %205 = tpu.matmul %204, %189, %cst_62 {dimension_numbers = #tpu.dot_dimension_numbers<[1], [0], [0], [1], [0, 0, 1, 1], [], []>} : vector<28x28xbf16>, vector<28x16xbf16>, vector<28x16xf32> -> vector<28x16xf32>
    %206 = arith.truncf %205 : vector<28x16xf32> to vector<28x16xbf16>
    %207 = vector.extract_strided_slice %156 {offsets = [16, 0], sizes = [16, 32], strides = [1, 1]} : vector<32x32xbf16> to vector<16x32xbf16>
    %cst_63 = arith.constant dense<0.000000e+00> : vector<28x32xf32>
    %208 = tpu.matmul %206, %207, %cst_63 {dimension_numbers = #tpu.dot_dimension_numbers<[1], [0], [0], [1], [0, 0, 1, 1], [], []>} : vector<28x16xbf16>, vector<16x32xbf16>, vector<28x32xf32> -> vector<28x32xf32>
    %209 = arith.addf %183, %208 : vector<28x32xf32>
    %210 = vector.extract_strided_slice %146 {offsets = [0, 96], sizes = [1, 32], strides = [1, 1]} : vector<1x128xf32> to vector<1x32xf32>
    %211 = vector.broadcast %210 : vector<1x32xf32> to vector<28x32xf32>
    %212 = arith.addf %209, %211 : vector<28x32xf32>
    %213 = arith.addf %7, %212 : vector<28x32xf32>
    %c9 = arith.constant 9 : index
    %c0_64 = arith.constant 0 : index
    %214 = vector.load %arg4[%c9, %c0_64] : memref<148x128xf32, #tpu.memory_space<vmem>>, vector<1x32xf32>
    %c14 = arith.constant 14 : index
    %c0_65 = arith.constant 0 : index
    %215 = vector.load %arg4[%c14, %c0_65] : memref<148x128xf32, #tpu.memory_space<vmem>>, vector<1x32xf32>
    %cst_66 = arith.constant dense<0.000000e+00> : vector<28xf32>
    %216 = vector.multi_reduction <add>, %213, %cst_66 [1] : vector<28x32xf32> to vector<28xf32>
    %217 = vector.shape_cast %216 : vector<28xf32> to vector<28x1xf32>
    %cst_67 = arith.constant 3.200000e+01 : f32
    %218 = vector.broadcast %cst_67 : f32 to vector<28x1xf32>
    %219 = arith.divf %217, %218 : vector<28x1xf32>
    %220 = arith.mulf %213, %213 : vector<28x32xf32>
    %cst_68 = arith.constant dense<0.000000e+00> : vector<28xf32>
    %221 = vector.multi_reduction <add>, %220, %cst_68 [1] : vector<28x32xf32> to vector<28xf32>
    %222 = vector.shape_cast %221 : vector<28xf32> to vector<28x1xf32>
    %cst_69 = arith.constant 3.200000e+01 : f32
    %223 = vector.broadcast %cst_69 : f32 to vector<28x1xf32>
    %224 = arith.divf %222, %223 : vector<28x1xf32>
    %225 = arith.mulf %219, %219 : vector<28x1xf32>
    %226 = arith.subf %224, %225 : vector<28x1xf32>
    %cst_70 = arith.constant 0.000000e+00 : f32
    %227 = vector.broadcast %cst_70 : f32 to vector<28x1xf32>
    %228 = arith.maximumf %226, %227 : vector<28x1xf32>
    %229 = vector.broadcast %219 : vector<28x1xf32> to vector<28x32xf32>
    %230 = arith.subf %213, %229 : vector<28x32xf32>
    %cst_71 = arith.constant 9.99999974E-6 : f32
    %231 = vector.broadcast %cst_71 : f32 to vector<28x1xf32>
    %232 = arith.addf %228, %231 : vector<28x1xf32>
    %233 = math.rsqrt %232 : vector<28x1xf32>
    %234 = vector.broadcast %233 : vector<28x1xf32> to vector<28x32xf32>
    %235 = arith.mulf %230, %234 : vector<28x32xf32>
    %236 = vector.broadcast %214 : vector<1x32xf32> to vector<28x32xf32>
    %237 = arith.mulf %235, %236 : vector<28x32xf32>
    %238 = vector.broadcast %215 : vector<1x32xf32> to vector<28x32xf32>
    %239 = arith.addf %237, %238 : vector<28x32xf32>
    %c0_72 = arith.constant 0 : index
    %c384 = arith.constant 384 : index
    %240 = vector.load %arg2[%c0_72, %c384] : memref<49x768xbf16, #tpu.memory_space<vmem>>, vector<32x128xbf16>
    %c2 = arith.constant 2 : index
    %c0_73 = arith.constant 0 : index
    %241 = vector.load %arg4[%c2, %c0_73] : memref<148x128xf32, #tpu.memory_space<vmem>>, vector<1x128xf32>
    %242 = arith.truncf %239 : vector<28x32xf32> to vector<28x32xbf16>
    %243 = vector.extract_strided_slice %240 {offsets = [0, 0], sizes = [32, 32], strides = [1, 1]} : vector<32x128xbf16> to vector<32x32xbf16>
    %cst_74 = arith.constant dense<0.000000e+00> : vector<28x32xf32>
    %244 = tpu.matmul %242, %243, %cst_74 {dimension_numbers = #tpu.dot_dimension_numbers<[1], [0], [0], [1], [0, 0, 1, 1], [], []>} : vector<28x32xbf16>, vector<32x32xbf16>, vector<28x32xf32> -> vector<28x32xf32>
    %245 = vector.extract_strided_slice %241 {offsets = [0, 0], sizes = [1, 32], strides = [1, 1]} : vector<1x128xf32> to vector<1x32xf32>
    %246 = vector.broadcast %245 : vector<1x32xf32> to vector<28x32xf32>
    %247 = arith.addf %244, %246 : vector<28x32xf32>
    %248 = arith.truncf %144 : vector<30x32xf32> to vector<30x32xbf16>
    %249 = vector.extract_strided_slice %240 {offsets = [0, 32], sizes = [32, 64], strides = [1, 1]} : vector<32x128xbf16> to vector<32x64xbf16>
    %cst_75 = arith.constant dense<0.000000e+00> : vector<30x64xf32>
    %250 = tpu.matmul %248, %249, %cst_75 {dimension_numbers = #tpu.dot_dimension_numbers<[1], [0], [0], [1], [0, 0, 1, 1], [], []>} : vector<30x32xbf16>, vector<32x64xbf16>, vector<30x64xf32> -> vector<30x64xf32>
    %251 = vector.extract_strided_slice %241 {offsets = [0, 32], sizes = [1, 64], strides = [1, 1]} : vector<1x128xf32> to vector<1x64xf32>
    %252 = vector.broadcast %251 : vector<1x64xf32> to vector<30x64xf32>
    %253 = arith.addf %250, %252 : vector<30x64xf32>
    %254 = vector.extract_strided_slice %253 {offsets = [0, 0], sizes = [30, 32], strides = [1, 1]} : vector<30x64xf32> to vector<30x32xf32>
    %255 = vector.extract_strided_slice %253 {offsets = [0, 32], sizes = [30, 32], strides = [1, 1]} : vector<30x64xf32> to vector<30x32xf32>
    %256 = vector.extract_strided_slice %240 {offsets = [0, 96], sizes = [32, 32], strides = [1, 1]} : vector<32x128xbf16> to vector<32x32xbf16>
    %cst_76 = arith.constant 0.000000e+00 : f32
    %257 = vector.broadcast %cst_76 : f32 to vector<28x32xf32>
    %258 = vector.extract_strided_slice %247 {offsets = [0, 0], sizes = [28, 16], strides = [1, 1]} : vector<28x32xf32> to vector<28x16xf32>
    %259 = arith.truncf %258 : vector<28x16xf32> to vector<28x16xbf16>
    %260 = vector.extract_strided_slice %254 {offsets = [0, 0], sizes = [30, 16], strides = [1, 1]} : vector<30x32xf32> to vector<30x16xf32>
    %261 = arith.truncf %260 : vector<30x16xf32> to vector<30x16xbf16>
    %262 = vector.extract_strided_slice %255 {offsets = [0, 0], sizes = [30, 16], strides = [1, 1]} : vector<30x32xf32> to vector<30x16xf32>
    %263 = arith.truncf %262 : vector<30x16xf32> to vector<30x16xbf16>
    %cst_77 = arith.constant dense<0.000000e+00> : vector<28x30xf32>
    %264 = tpu.matmul %259, %261, %cst_77 {dimension_numbers = #tpu.dot_dimension_numbers<[1], [1], [0], [0], [0, 0, 1, 0], [], []>} : vector<28x16xbf16>, vector<30x16xbf16>, vector<28x30xf32> -> vector<28x30xf32>
    %cst_78 = arith.constant 2.500000e-01 : f32
    %265 = vector.broadcast %cst_78 : f32 to vector<28x30xf32>
    %266 = arith.mulf %264, %265 : vector<28x30xf32>
    %267 = arith.addf %266, %2 : vector<28x30xf32>
    %cst_79 = arith.constant dense<0xFF800000> : vector<28xf32>
    %268 = vector.multi_reduction <maximumf>, %267, %cst_79 [1] : vector<28x30xf32> to vector<28xf32>
    %269 = vector.shape_cast %268 : vector<28xf32> to vector<28x1xf32>
    %270 = vector.broadcast %269 : vector<28x1xf32> to vector<28x30xf32>
    %271 = arith.subf %267, %270 : vector<28x30xf32>
    %272 = math.exp %271 : vector<28x30xf32>
    %cst_80 = arith.constant dense<0.000000e+00> : vector<28xf32>
    %273 = vector.multi_reduction <add>, %272, %cst_80 [1] : vector<28x30xf32> to vector<28xf32>
    %274 = vector.shape_cast %273 : vector<28xf32> to vector<28x1xf32>
    %275 = tpu.reciprocal %274 {approx = true} : vector<28x1xf32> -> vector<28x1xf32>
    %276 = vector.broadcast %275 : vector<28x1xf32> to vector<28x30xf32>
    %277 = arith.mulf %272, %276 : vector<28x30xf32>
    %278 = arith.truncf %277 : vector<28x30xf32> to vector<28x30xbf16>
    %cst_81 = arith.constant dense<0.000000e+00> : vector<28x16xf32>
    %279 = tpu.matmul %278, %263, %cst_81 {dimension_numbers = #tpu.dot_dimension_numbers<[1], [0], [0], [1], [0, 0, 1, 1], [], []>} : vector<28x30xbf16>, vector<30x16xbf16>, vector<28x16xf32> -> vector<28x16xf32>
    %280 = arith.truncf %279 : vector<28x16xf32> to vector<28x16xbf16>
    %281 = vector.extract_strided_slice %256 {offsets = [0, 0], sizes = [16, 32], strides = [1, 1]} : vector<32x32xbf16> to vector<16x32xbf16>
    %cst_82 = arith.constant dense<0.000000e+00> : vector<28x32xf32>
    %282 = tpu.matmul %280, %281, %cst_82 {dimension_numbers = #tpu.dot_dimension_numbers<[1], [0], [0], [1], [0, 0, 1, 1], [], []>} : vector<28x16xbf16>, vector<16x32xbf16>, vector<28x32xf32> -> vector<28x32xf32>
    %283 = arith.addf %257, %282 : vector<28x32xf32>
    %284 = vector.extract_strided_slice %247 {offsets = [0, 16], sizes = [28, 16], strides = [1, 1]} : vector<28x32xf32> to vector<28x16xf32>
    %285 = arith.truncf %284 : vector<28x16xf32> to vector<28x16xbf16>
    %286 = vector.extract_strided_slice %254 {offsets = [0, 16], sizes = [30, 16], strides = [1, 1]} : vector<30x32xf32> to vector<30x16xf32>
    %287 = arith.truncf %286 : vector<30x16xf32> to vector<30x16xbf16>
    %288 = vector.extract_strided_slice %255 {offsets = [0, 16], sizes = [30, 16], strides = [1, 1]} : vector<30x32xf32> to vector<30x16xf32>
    %289 = arith.truncf %288 : vector<30x16xf32> to vector<30x16xbf16>
    %cst_83 = arith.constant dense<0.000000e+00> : vector<28x30xf32>
    %290 = tpu.matmul %285, %287, %cst_83 {dimension_numbers = #tpu.dot_dimension_numbers<[1], [1], [0], [0], [0, 0, 1, 0], [], []>} : vector<28x16xbf16>, vector<30x16xbf16>, vector<28x30xf32> -> vector<28x30xf32>
    %cst_84 = arith.constant 2.500000e-01 : f32
    %291 = vector.broadcast %cst_84 : f32 to vector<28x30xf32>
    %292 = arith.mulf %290, %291 : vector<28x30xf32>
    %293 = arith.addf %292, %2 : vector<28x30xf32>
    %cst_85 = arith.constant dense<0xFF800000> : vector<28xf32>
    %294 = vector.multi_reduction <maximumf>, %293, %cst_85 [1] : vector<28x30xf32> to vector<28xf32>
    %295 = vector.shape_cast %294 : vector<28xf32> to vector<28x1xf32>
    %296 = vector.broadcast %295 : vector<28x1xf32> to vector<28x30xf32>
    %297 = arith.subf %293, %296 : vector<28x30xf32>
    %298 = math.exp %297 : vector<28x30xf32>
    %cst_86 = arith.constant dense<0.000000e+00> : vector<28xf32>
    %299 = vector.multi_reduction <add>, %298, %cst_86 [1] : vector<28x30xf32> to vector<28xf32>
    %300 = vector.shape_cast %299 : vector<28xf32> to vector<28x1xf32>
    %301 = tpu.reciprocal %300 {approx = true} : vector<28x1xf32> -> vector<28x1xf32>
    %302 = vector.broadcast %301 : vector<28x1xf32> to vector<28x30xf32>
    %303 = arith.mulf %298, %302 : vector<28x30xf32>
    %304 = arith.truncf %303 : vector<28x30xf32> to vector<28x30xbf16>
    %cst_87 = arith.constant dense<0.000000e+00> : vector<28x16xf32>
    %305 = tpu.matmul %304, %289, %cst_87 {dimension_numbers = #tpu.dot_dimension_numbers<[1], [0], [0], [1], [0, 0, 1, 1], [], []>} : vector<28x30xbf16>, vector<30x16xbf16>, vector<28x16xf32> -> vector<28x16xf32>
    %306 = arith.truncf %305 : vector<28x16xf32> to vector<28x16xbf16>
    %307 = vector.extract_strided_slice %256 {offsets = [16, 0], sizes = [16, 32], strides = [1, 1]} : vector<32x32xbf16> to vector<16x32xbf16>
    %cst_88 = arith.constant dense<0.000000e+00> : vector<28x32xf32>
    %308 = tpu.matmul %306, %307, %cst_88 {dimension_numbers = #tpu.dot_dimension_numbers<[1], [0], [0], [1], [0, 0, 1, 1], [], []>} : vector<28x16xbf16>, vector<16x32xbf16>, vector<28x32xf32> -> vector<28x32xf32>
    %309 = arith.addf %283, %308 : vector<28x32xf32>
    %310 = vector.extract_strided_slice %241 {offsets = [0, 96], sizes = [1, 32], strides = [1, 1]} : vector<1x128xf32> to vector<1x32xf32>
    %311 = vector.broadcast %310 : vector<1x32xf32> to vector<28x32xf32>
    %312 = arith.addf %309, %311 : vector<28x32xf32>
    %313 = arith.addf %239, %312 : vector<28x32xf32>
    %c10 = arith.constant 10 : index
    %c0_89 = arith.constant 0 : index
    %314 = vector.load %arg4[%c10, %c0_89] : memref<148x128xf32, #tpu.memory_space<vmem>>, vector<1x32xf32>
    %c15 = arith.constant 15 : index
    %c0_90 = arith.constant 0 : index
    %315 = vector.load %arg4[%c15, %c0_90] : memref<148x128xf32, #tpu.memory_space<vmem>>, vector<1x32xf32>
    %cst_91 = arith.constant dense<0.000000e+00> : vector<28xf32>
    %316 = vector.multi_reduction <add>, %313, %cst_91 [1] : vector<28x32xf32> to vector<28xf32>
    %317 = vector.shape_cast %316 : vector<28xf32> to vector<28x1xf32>
    %cst_92 = arith.constant 3.200000e+01 : f32
    %318 = vector.broadcast %cst_92 : f32 to vector<28x1xf32>
    %319 = arith.divf %317, %318 : vector<28x1xf32>
    %320 = arith.mulf %313, %313 : vector<28x32xf32>
    %cst_93 = arith.constant dense<0.000000e+00> : vector<28xf32>
    %321 = vector.multi_reduction <add>, %320, %cst_93 [1] : vector<28x32xf32> to vector<28xf32>
    %322 = vector.shape_cast %321 : vector<28xf32> to vector<28x1xf32>
    %cst_94 = arith.constant 3.200000e+01 : f32
    %323 = vector.broadcast %cst_94 : f32 to vector<28x1xf32>
    %324 = arith.divf %322, %323 : vector<28x1xf32>
    %325 = arith.mulf %319, %319 : vector<28x1xf32>
    %326 = arith.subf %324, %325 : vector<28x1xf32>
    %cst_95 = arith.constant 0.000000e+00 : f32
    %327 = vector.broadcast %cst_95 : f32 to vector<28x1xf32>
    %328 = arith.maximumf %326, %327 : vector<28x1xf32>
    %329 = vector.broadcast %319 : vector<28x1xf32> to vector<28x32xf32>
    %330 = arith.subf %313, %329 : vector<28x32xf32>
    %cst_96 = arith.constant 9.99999974E-6 : f32
    %331 = vector.broadcast %cst_96 : f32 to vector<28x1xf32>
    %332 = arith.addf %328, %331 : vector<28x1xf32>
    %333 = math.rsqrt %332 : vector<28x1xf32>
    %334 = vector.broadcast %333 : vector<28x1xf32> to vector<28x32xf32>
    %335 = arith.mulf %330, %334 : vector<28x32xf32>
    %336 = vector.broadcast %314 : vector<1x32xf32> to vector<28x32xf32>
    %337 = arith.mulf %335, %336 : vector<28x32xf32>
    %338 = vector.broadcast %315 : vector<1x32xf32> to vector<28x32xf32>
    %339 = arith.addf %337, %338 : vector<28x32xf32>
    %340 = arith.truncf %339 : vector<28x32xf32> to vector<28x32xbf16>
    %c0_97 = arith.constant 0 : index
    %c640 = arith.constant 640 : index
    %341 = vector.load %arg2[%c0_97, %c640] : memref<49x768xbf16, #tpu.memory_space<vmem>>, vector<32x128xbf16>
    %cst_98 = arith.constant dense<0.000000e+00> : vector<28x128xf32>
    %342 = tpu.matmul %340, %341, %cst_98 {dimension_numbers = #tpu.dot_dimension_numbers<[1], [0], [0], [1], [0, 0, 1, 1], [], []>} : vector<28x32xbf16>, vector<32x128xbf16>, vector<28x128xf32> -> vector<28x128xf32>
    %c4 = arith.constant 4 : index
    %c0_99 = arith.constant 0 : index
    %343 = vector.load %arg4[%c4, %c0_99] : memref<148x128xf32, #tpu.memory_space<vmem>>, vector<1x128xf32>
    %344 = vector.broadcast %343 : vector<1x128xf32> to vector<28x128xf32>
    %345 = arith.addf %342, %344 : vector<28x128xf32>
    %cst_100 = arith.constant 0.000000e+00 : f32
    %346 = vector.broadcast %cst_100 : f32 to vector<28x128xf32>
    %347 = arith.maximumf %345, %346 : vector<28x128xf32>
    %348 = arith.truncf %347 : vector<28x128xf32> to vector<28x128xbf16>
    %c1_101 = arith.constant 1 : index
    %c0_102 = arith.constant 0 : index
    %c0_103 = arith.constant 0 : index
    %349 = vector.load %arg3[%c1_101, %c0_102, %c0_103] : memref<2x128x32xbf16, #tpu.memory_space<vmem>>, vector<1x128x32xbf16>
    %350 = vector.shape_cast %349 : vector<1x128x32xbf16> to vector<128x32xbf16>
    %cst_104 = arith.constant dense<0.000000e+00> : vector<28x32xf32>
    %351 = tpu.matmul %348, %350, %cst_104 {dimension_numbers = #tpu.dot_dimension_numbers<[1], [0], [0], [1], [0, 0, 1, 1], [], []>} : vector<28x128xbf16>, vector<128x32xbf16>, vector<28x32xf32> -> vector<28x32xf32>
    %c6 = arith.constant 6 : index
    %c0_105 = arith.constant 0 : index
    %352 = vector.load %arg4[%c6, %c0_105] : memref<148x128xf32, #tpu.memory_space<vmem>>, vector<1x32xf32>
    %353 = vector.broadcast %352 : vector<1x32xf32> to vector<28x32xf32>
    %354 = arith.addf %351, %353 : vector<28x32xf32>
    %355 = arith.addf %339, %354 : vector<28x32xf32>
    %c11 = arith.constant 11 : index
    %c0_106 = arith.constant 0 : index
    %356 = vector.load %arg4[%c11, %c0_106] : memref<148x128xf32, #tpu.memory_space<vmem>>, vector<1x32xf32>
    %c16 = arith.constant 16 : index
    %c0_107 = arith.constant 0 : index
    %357 = vector.load %arg4[%c16, %c0_107] : memref<148x128xf32, #tpu.memory_space<vmem>>, vector<1x32xf32>
    %cst_108 = arith.constant dense<0.000000e+00> : vector<28xf32>
    %358 = vector.multi_reduction <add>, %355, %cst_108 [1] : vector<28x32xf32> to vector<28xf32>
    %359 = vector.shape_cast %358 : vector<28xf32> to vector<28x1xf32>
    %cst_109 = arith.constant 3.200000e+01 : f32
    %360 = vector.broadcast %cst_109 : f32 to vector<28x1xf32>
    %361 = arith.divf %359, %360 : vector<28x1xf32>
    %362 = arith.mulf %355, %355 : vector<28x32xf32>
    %cst_110 = arith.constant dense<0.000000e+00> : vector<28xf32>
    %363 = vector.multi_reduction <add>, %362, %cst_110 [1] : vector<28x32xf32> to vector<28xf32>
    %364 = vector.shape_cast %363 : vector<28xf32> to vector<28x1xf32>
    %cst_111 = arith.constant 3.200000e+01 : f32
    %365 = vector.broadcast %cst_111 : f32 to vector<28x1xf32>
    %366 = arith.divf %364, %365 : vector<28x1xf32>
    %367 = arith.mulf %361, %361 : vector<28x1xf32>
    %368 = arith.subf %366, %367 : vector<28x1xf32>
    %cst_112 = arith.constant 0.000000e+00 : f32
    %369 = vector.broadcast %cst_112 : f32 to vector<28x1xf32>
    %370 = arith.maximumf %368, %369 : vector<28x1xf32>
    %371 = vector.broadcast %361 : vector<28x1xf32> to vector<28x32xf32>
    %372 = arith.subf %355, %371 : vector<28x32xf32>
    %cst_113 = arith.constant 9.99999974E-6 : f32
    %373 = vector.broadcast %cst_113 : f32 to vector<28x1xf32>
    %374 = arith.addf %370, %373 : vector<28x1xf32>
    %375 = math.rsqrt %374 : vector<28x1xf32>
    %376 = vector.broadcast %375 : vector<28x1xf32> to vector<28x32xf32>
    %377 = arith.mulf %372, %376 : vector<28x32xf32>
    %378 = vector.broadcast %356 : vector<1x32xf32> to vector<28x32xf32>
    %379 = arith.mulf %377, %378 : vector<28x32xf32>
    %380 = vector.broadcast %357 : vector<1x32xf32> to vector<28x32xf32>
    %381 = arith.addf %379, %380 : vector<28x32xf32>
    %c17 = arith.constant 17 : index
    %c0_114 = arith.constant 0 : index
    %382 = vector.load %arg4[%c17, %c0_114] : memref<148x128xf32, #tpu.memory_space<vmem>>, vector<1x32xf32>
    %c24 = arith.constant 24 : index
    %c0_115 = arith.constant 0 : index
    %383 = vector.load %arg4[%c24, %c0_115] : memref<148x128xf32, #tpu.memory_space<vmem>>, vector<28x18xf32>
    %c18 = arith.constant 18 : index
    %c0_116 = arith.constant 0 : index
    %384 = vector.load %arg4[%c18, %c0_116] : memref<148x128xf32, #tpu.memory_space<vmem>>, vector<1x18xf32>
    %cst_117 = arith.constant dense<0.000000e+00> : vector<1x28xf32>
    %385 = tpu.matmul %382, %381, %cst_117 {dimension_numbers = #tpu.dot_dimension_numbers<[1], [1], [0], [0], [0, 0, 1, 0], [], []>} : vector<1x32xf32>, vector<28x32xf32>, vector<1x28xf32> -> vector<1x28xf32>
    %cst_118 = arith.constant dense<0.000000e+00> : vector<1x18xf32>
    %386 = tpu.matmul %385, %383, %cst_118 {dimension_numbers = #tpu.dot_dimension_numbers<[1], [0], [0], [1], [0, 0, 1, 1], [], []>} : vector<1x28xf32>, vector<28x18xf32>, vector<1x18xf32> -> vector<1x18xf32>
    %387 = arith.addf %386, %384 : vector<1x18xf32>
    %cst_119 = arith.constant 0.000000e+00 : f32
    %388 = vector.broadcast %cst_119 : f32 to vector<3x32xf32>
    %c0_120 = arith.constant 0 : index
    %c0_121 = arith.constant 0 : index
    %389 = vector.load %arg5[%c0_120, %c0_121] : memref<3x32xf32, #tpu.memory_space<vmem>>, vector<3x32xf32>
    tpu.vector_store %arg5[%c0_120, %c0_121], %388 {strides = array<i32>} : memref<3x32xf32, #tpu.memory_space<vmem>>, vector<3x32xf32>,
    %c0_122 = arith.constant 0 : index
    %c0_123 = arith.constant 0 : index
    %390 = vector.load %arg5[%c0_122, %c0_123] : memref<3x32xf32, #tpu.memory_space<vmem>>, vector<1x18xf32>
    tpu.vector_store %arg5[%c0_122, %c0_123], %387 {strides = array<i32>} : memref<3x32xf32, #tpu.memory_space<vmem>>, vector<1x18xf32>,
    %391 = vector.extract_strided_slice %144 {offsets = [28, 0], sizes = [2, 32], strides = [1, 1]} : vector<30x32xf32> to vector<2x32xf32>
    %c1_124 = arith.constant 1 : index
    %c0_125 = arith.constant 0 : index
    %392 = vector.load %arg5[%c1_124, %c0_125] : memref<3x32xf32, #tpu.memory_space<vmem>>, vector<2x32xf32>
    tpu.vector_store %arg5[%c1_124, %c0_125], %391 {strides = array<i32>} : memref<3x32xf32, #tpu.memory_space<vmem>>, vector<2x32xf32>,
    return
  }
  func.func @transform_0(%arg0: i32) -> (i32, i32) {
    %c0_i32 = arith.constant 0 : i32
    %c0_i32_0 = arith.constant 0 : i32
    %c0_i32_1 = arith.constant 0 : i32
    return %c0_i32, %c0_i32_0 : i32, i32
  }
  func.func @transform_1(%arg0: i32) -> (i32, i32) {
    %c0_i32 = arith.constant 0 : i32
    %c0_i32_0 = arith.constant 0 : i32
    %c0_i32_1 = arith.constant 0 : i32
    return %c0_i32, %c0_i32_0 : i32, i32
  }
  func.func @transform_2(%arg0: i32) -> (i32, i32, i32) {
    %c0_i32 = arith.constant 0 : i32
    %c0_i32_0 = arith.constant 0 : i32
    %c0_i32_1 = arith.constant 0 : i32
    %c0_i32_2 = arith.constant 0 : i32
    return %c0_i32, %c0_i32_0, %c0_i32_1 : i32, i32, i32
  }
  func.func @transform_3(%arg0: i32) -> (i32, i32) {
    %c0_i32 = arith.constant 0 : i32
    %c0_i32_0 = arith.constant 0 : i32
    %c0_i32_1 = arith.constant 0 : i32
    return %c0_i32, %c0_i32_0 : i32, i32
  }
  func.func @transform_4(%arg0: i32) -> (i32, i32) {
    %c0_i32 = arith.constant 0 : i32
    %c0_i32_0 = arith.constant 0 : i32
    %c0_i32_1 = arith.constant 0 : i32
    return %c0_i32, %c0_i32_0 : i32, i32
  }
}

</mosaic_0001>

<llo_original>
// kernel: squeeze.31
$region0: #{squeeze.31}
  %s0 = inlined_call_operand.vmem [shape: f32[18], index: 0, kind: input, shape index: {}]
  %s1 = inlined_call_operand.hbm [shape: f32[2,9], index: 1, kind: output, shape index: {}]
  $region1: #{squeeze.31} parent=0
    #allocation0 [shape = 'u8[1024]{0}', space=vmem, size = 0x400, scoped, tag = 'operand span for operand 1']
    #allocation1 [shape = 's32[1]{0}', space=sflag, size = 0x4, scoped, tag = 'scoped memory for squeeze.31']
    #allocation2 [shape = 'u8[4096]{0}', space=vmem, size = 0x1000, scoped, tag = 'scoped mem for output reshape']
    #allocation3 [shape = 'u8[4096]{0}', space=vmem, size = 0x1000, scoped, tag = 'scoped mem for input reshape']
    %2 = vsyncpa [#allocation1], 0
    %s4 = ssub.s32 2, 1
    %v5 = vld [vmem:[%s0] sm:%s4]
    %6 = vst [vmem:[#allocation3] sm:%s4] %v5
    %v7 = vld [vmem:[#allocation3] sm:$0x1]
    %vm8 = vcmask 72704
    %9 = vst.msk [vmem:[#allocation2] sm:$0x1] %vm8, %v7
    %v10 = vld [vmem:[#allocation3] sm:$0x1]
    %11 = vrot.lane.b32.xlu0 %v10, 119
    %v12 = vpop.permute.xlu0 %11
    %vm13 = vcmask 72704
    %s14 = scalar_lea.vmem [#allocation2], 1
    %15 = vst.msk [vmem:[%s14] sm:$0x1] %vm13, %v12
    %s17 = ssub.s32 4, 1
    %v18 = vld [vmem:[#allocation2] sm:%s17]
    %s20 = ssub.s32 4, 1
    %21 = vst [vmem:[#allocation0] sm:%s20] %v18
    %23 = vsyncadd [#allocation1], 0
    %s25 = sshll.u32 [#allocation0], 4
    %s26 = int_to_ptr.vmem [resolvable:$true] %s25
    %s27 = sshll.u32 %s1, 4
    %s28 = int_to_ptr.hbm [resolvable:$true] %s27
    %30 = dma.vmem_to_hbm [thread:$0]  %s26, 32, %s28, [#allocation1]
    %32 = dma.done [#allocation1], 32
    %33 = vsyncpa [#allocation1], 1

// kernel: transfermer_forward.1
$region0: #{transfermer_forward.1}
  #allocation0 [shape = 'u32[]', space=smem, size = 0x4, offset = 0x4, fixed_abs, tag = 'smem constant byte address 0x4 - core index']
  #allocation1 [shape = 'u32[72,128]{1,0:T(1,128)}', space=vmem, size = 0x9000, scoped, tag = 'internal scratch']
  %s0 = inlined_call_operand.vmem [shape: bf16[60,49], index: 0, kind: input, shape index: {}]
  %s1 = inlined_call_operand.vmem [shape: bf16[49,768], index: 1, kind: input, shape index: {}]
  %s2 = inlined_call_operand.vmem [shape: bf16[2,128,32], index: 2, kind: input, shape index: {}]
  %s3 = inlined_call_operand.vmem [shape: f32[148,128], index: 3, kind: input, shape index: {}]
  %s4 = inlined_call_operand.vmem [shape: f32[3,32], index: 4, kind: output, shape index: {}]
  %s5 = sld [smem:[#allocation0]]
  $region26: #{transfermer_forward.1} parent=0
    _
  %s7 = ssub.s32 1, %s5
  %s8 = scalar_select 0, %s7, %s5
  // Predicated region
  $region2: #{transfermer_forward.1} parent=0 // pred_check
    _
  $region3: #{transfermer_forward.1} parent=0 // pred_check_branch
    %10 = sbr.rel (0) target = $region5
  $region4: #{transfermer_forward.1} parent=0 // pred_region
    _
  $region5: #{transfermer_forward.1} parent=0 // pred_fallthru
    _
  // Predicated region
  $region6: #{transfermer_forward.1} parent=0 // pred_check
    _
  $region7: #{transfermer_forward.1} parent=0 // pred_check_branch
    %12 = sbr.rel (0) target = $region9
  $region8: #{transfermer_forward.1} parent=0 // pred_region
    _
  $region9: #{transfermer_forward.1} parent=0 // pred_fallthru
    _
  // Predicated region
  $region10: #{transfermer_forward.1} parent=0 // pred_check
    _
  $region11: #{transfermer_forward.1} parent=0 // pred_check_branch
    %14 = sbr.rel (0) target = $region13
  $region12: #{transfermer_forward.1} parent=0 // pred_region
    _
  $region13: #{transfermer_forward.1} parent=0 // pred_fallthru
    _
  // Predicated region
  $region14: #{transfermer_forward.1} parent=0 // pred_check
    _
  $region15: #{transfermer_forward.1} parent=0 // pred_check_branch
    %16 = sbr.rel (0) target = $region17
  $region16: #{transfermer_forward.1} parent=0 // pred_region
    _
  $region17: #{transfermer_forward.1} parent=0 // pred_fallthru
    _
  %v18 = vld [vmem:[%s3 + $0x38] sm:$0xff]
  %v19 = vld [vmem:[%s3 + $0x40] sm:$0xff]
  %v20 = vld [vmem:[%s3 + $0x48] sm:$0xff]
  %v21 = vld [vmem:[%s3 + $0x50] sm:$0x3f]
  %v22 = vld [vmem:[%s3 + $0x58] sm:$0xff]
  %v23 = vld [vmem:[%s3 + $0x60] sm:$0xff]
  %v24 = vld [vmem:[%s3 + $0x68] sm:$0xff]
  %v25 = vld [vmem:[%s3 + $0x70] sm:$0xf]
  %v26 = vld [vmem:[%s3 + $0x78] sm:$0xff]
  %v27 = vld [vmem:[%s3 + $0x80] sm:$0xff]
  %v28 = vld [vmem:[%s3 + $0x88] sm:$0xff]
  %v29 = vld [vmem:[%s3 + $0x90] sm:$0xf]
  %v30 = vld [vmem:[%s0] sm:$0xf]
  %v31 = vld [vmem:[%s0 + $0x4] sm:$0xf]
  %v32 = vld [vmem:[%s0 + $0x8] sm:$0xf]
  %v33 = vld [vmem:[%s0 + $0xc] sm:$0xf]
  %v34 = vld [vmem:[%s0 + $0x10] sm:$0xf]
  %v35 = vld [vmem:[%s0 + $0x14] sm:$0xf]
  %v36 = vld [vmem:[%s0 + $0x18] sm:$0xf]
  %v37 = vld [vmem:[%s0 + $0x1c] sm:$0x3]
  %v38 = vld [vmem:[%s1] sm:$0xf]
  %v39 = vld [vmem:[%s1 + $0x18] sm:$0xf]
  %v40 = vld [vmem:[%s1 + $0x30] sm:$0xf]
  %v41 = vld [vmem:[%s1 + $0x48] sm:$0xf]
  %v42 = vld [vmem:[%s1 + $0x60] sm:$0xf]
  %v43 = vld [vmem:[%s1 + $0x78] sm:$0xf]
  %v44 = vld [vmem:[%s1 + $0x90] sm:$0x1]
  %v53 = vunpack.c.l.b16 %v30
  %v54 = vunpack.c.l.b16 %v31
  %v55 = vunpack.c.l.b16 %v32
  %v56 = vunpack.c.l.b16 %v33
  %v57 = vunpack.c.l.b16 %v34
  %v58 = vunpack.c.l.b16 %v35
  %v59 = vunpack.c.l.b16 %v36
  %v60 = vunpack.c.l.b16 %v37
  %v61 = vpack.c.b16 %v54, %v53
  %v62 = vpack.c.b16 %v56, %v55
  %v63 = vpack.c.b16 %v58, %v57
  %v64 = vpack.c.b16 %v60, %v59
  %v72 = vunpack.c.l.b16 %v38
  %v73 = vunpack.c.l.b16 %v39
  %v74 = vunpack.c.l.b16 %v40
  %v75 = vunpack.c.l.b16 %v41
  %v76 = vunpack.c.l.b16 %v42
  %v77 = vunpack.c.l.b16 %v43
  %v78 = vunpack.c.l.b16 %v44
  %v79 = vpack.c.b16 %v73, %v72
  %v80 = vpack.c.b16 %v75, %v74
  %v81 = vpack.c.b16 %v77, %v76
  %v82 = vpack.c.b16 %v78, %v78
  %vm86 = vcmask 400384
  %v88 = vsel %vm86, %v61, 0
  %v91 = vsel %vm86, %v62, 0
  %v94 = vsel %vm86, %v63, 0
  %v97 = vsel %vm86, %v64, 0
  %vm99 = vcmask 1040384
  %v100 = vsel 0, 4294967295, 65535
  %v101 = vsel %vm99, %v100, 0
  %v103 = vand.u32 %v82, %v101
  %105 = vmatpush.bf16.msra.mxu0 0
  %106 = vmatpush.bf16.msra.mxu0 0
  %107 = vmatpush.bf16.msra.mxu0 0
  %108 = vmatpush.bf16.msra.mxu0 0
  %109 = vmatpush.bf16.msra.mxu0 %v103
  %110 = vmatpush.bf16.msra.mxu0 %v81
  %111 = vmatpush.bf16.msra.mxu0 %v80
  %112 = vmatpush.bf16.msra.mxu0 %v79
  %113 = vmatmul.bf16.gmra.mxu0 %v88
  %v114 = vpop.f32.mrf.mxu0
  %v115 = vadd.f32 0.0, %v114
  %v116 = vpop.f32.mrf.mxu0
  %v117 = vadd.f32 0.0, %v116
  %118 = vmatmul.bf16.gmra.mxu0 %v91
  %v119 = vpop.f32.mrf.mxu0
  %v120 = vadd.f32 0.0, %v119
  %v121 = vpop.f32.mrf.mxu0
  %v122 = vadd.f32 0.0, %v121
  %123 = vmatmul.bf16.gmra.mxu0 %v94
  %v124 = vpop.f32.mrf.mxu0
  %v125 = vadd.f32 0.0, %v124
  %v126 = vpop.f32.mrf.mxu0
  %v127 = vadd.f32 0.0, %v126
  %128 = vmatmul.bf16.gmra.mxu0 %v97
  %v129 = vpop.f32.mrf.mxu0
  %v130 = vadd.f32 0.0, %v129
  %v131 = vpop.f32.mrf.mxu0
  %v132 = vadd.f32 0.0, %v131
  %133 = vdwg.mxu0
  %v134 = vld [vmem:[%s1 + $0x4] sm:$0xf]
  %v135 = vld [vmem:[%s1 + $0x1c] sm:$0xf]
  %v136 = vld [vmem:[%s1 + $0x34] sm:$0xf]
  %v137 = vld [vmem:[%s1 + $0x4c] sm:$0xf]
  %v138 = vld [vmem:[%s3] sm:$0x1]
  %v139 = vpack.c.bf16 %v117, %v115
  %v140 = vpack.c.bf16 %v122, %v120
  %v141 = vperm.slane %v138, 0
  %v146 = vunpack.c.l.b16 %v134
  %v147 = vunpack.c.l.b16 %v135
  %v148 = vunpack.c.l.b16 %v136
  %v149 = vunpack.c.l.b16 %v137
  %v150 = vpack.c.b16 %v147, %v146
  %v151 = vpack.c.b16 %v149, %v148
  %vm154 = vcmask 261120
  %v156 = vsel %vm154, %v139, 0
  %v159 = vsel %vm154, %v140, 0
  %161 = vmatpush.bf16.msra.mxu0 0
  %162 = vmatpush.bf16.msra.mxu0 0
  %163 = vmatpush.bf16.msra.mxu0 0
  %164 = vmatpush.bf16.msra.mxu0 0
  %165 = vmatpush.bf16.msra.mxu0 0
  %166 = vmatpush.bf16.msra.mxu0 0
  %167 = vmatpush.bf16.msra.mxu0 %v151
  %168 = vmatpush.bf16.msra.mxu0 %v150
  %169 = vmatmul.bf16.gmra.mxu0 %v156
  %v170 = vpop.f32.mrf.mxu0
  %v171 = vadd.f32 %v141, %v170
  %v172 = vpop.f32.mrf.mxu0
  %v173 = vadd.f32 %v141, %v172
  %174 = vmatmul.bf16.gmra.mxu0 %v159
  %v175 = vpop.f32.mrf.mxu0
  %v176 = vadd.f32 %v141, %v175
  %v177 = vpop.f32.mrf.mxu0
  %v178 = vadd.f32 %v141, %v177
  %179 = vdwg.mxu0
  %v180 = vpack.c.bf16 %v173, %v171
  %v181 = vpack.c.bf16 %v178, %v176
  %184 = vrot.lane.b32.xlu0 %v180, 96
  %v185 = vpop.permute.xlu0 %184
  %186 = vrot.lane.b32.xlu0 %v181, 96
  %v187 = vpop.permute.xlu0 %186
  %vm188 = vcmask 130048
  %v190 = vsel %vm188, %v180, 0
  %v193 = vsel %vm188, %v181, 0
  %v196 = vsel %vm188, %v185, 0
  %v199 = vsel %vm188, %v187, 0
  %201 = vmatpush.bf16.xpose.msra.mxu0 0
  %202 = vmatpush.bf16.xpose.msra.mxu0 0
  %203 = vmatpush.bf16.xpose.msra.mxu0 0
  %204 = vmatpush.bf16.xpose.msra.mxu0 0
  %205 = vmatpush.bf16.xpose.msra.mxu0 0
  %206 = vmatpush.bf16.xpose.msra.mxu0 0
  %207 = vmatpush.bf16.xpose.msra.mxu0 %v199
  %208 = vmatpush.bf16.xpose.msra.mxu0 %v196
  %209 = vmatmul.bf16.gmra.mxu0 %v190
  %v210 = vpop.f32.mrf.mxu0
  %v211 = vadd.f32 0.0, %v210
  %v212 = vpop.f32.mrf.mxu0
  %v213 = vadd.f32 0.0, %v212
  %214 = vmatmul.bf16.gmra.mxu0 %v193
  %v215 = vpop.f32.mrf.mxu0
  %v216 = vadd.f32 0.0, %v215
  %v217 = vpop.f32.mrf.mxu0
  %v218 = vadd.f32 0.0, %v217
  %219 = vdwg.mxu0
  %v220 = vmul.f32 %v211, 0.25
  %v221 = vmul.f32 %v213, 0.25
  %v222 = vmul.f32 %v216, 0.25
  %v223 = vmul.f32 %v218, 0.25
  %v224 = vadd.f32 %v220, %v18
  %v225 = vadd.f32 %v221, %v19
  %v226 = vadd.f32 %v222, %v20
  %v227 = vadd.f32 %v223, %v21
  %vm228 = vcmask 244736
  %v229 = vsel %vm228, %v224, -inf
  %230 = vmax.xlane.f32.xlu0 %v229
  %v231 = vpop.xlane.xlu0 %230
  %v232 = vsel %vm228, %v225, -inf
  %233 = vmax.xlane.f32.xlu0 %v232
  %v234 = vpop.xlane.xlu0 %233
  %v235 = vsel %vm228, %v226, -inf
  %236 = vmax.xlane.f32.xlu0 %v235
  %v237 = vpop.xlane.xlu0 %236
  %vm238 = vcmask 242688
  %v239 = vsel %vm238, %v227, -inf
  %240 = vmax.xlane.f32.xlu0 %v239
  %v241 = vpop.xlane.xlu0 %240
  %v242 = vsub.f32 %v224, %v231
  %v243 = vsub.f32 %v225, %v234
  %v244 = vsub.f32 %v226, %v237
  %v245 = vsub.f32 %v227, %v241
  %v246 = vmul.f32 %v242, 1.442695
  %v247 = vpow.pop %v246
  %v248 = vmul.f32 %v243, 1.442695
  %v249 = vpow.pop %v248
  %v250 = vmul.f32 %v244, 1.442695
  %v251 = vpow.pop %v250
  %v252 = vmul.f32 %v245, 1.442695
  %v253 = vpow.pop %v252
  %v254 = vsel %vm228, %v247, 0.0
  %255 = vadd.xlane.f32.xlu0 %v254
  %v256 = vpop.xlane.xlu0 %255
  %v257 = vsel %vm228, %v249, 0.0
  %258 = vadd.xlane.f32.xlu0 %v257
  %v259 = vpop.xlane.xlu0 %258
  %v260 = vsel %vm228, %v251, 0.0
  %261 = vadd.xlane.f32.xlu0 %v260
  %v262 = vpop.xlane.xlu0 %261
  %v263 = vsel %vm238, %v253, 0.0
  %264 = vadd.xlane.f32.xlu0 %v263
  %v265 = vpop.xlane.xlu0 %264
  %v266 = vrcp.pop %v256
  %v267 = vrcp.pop %v259
  %v268 = vrcp.pop %v262
  %v269 = vrcp.pop %v265
  %v270 = vmul.f32 %v247, %v266
  %v271 = vmul.f32 %v249, %v267
  %v272 = vmul.f32 %v251, %v268
  %v273 = vmul.f32 %v253, %v269
  %v274 = vpack.c.bf16 %v271, %v270
  %v275 = vpack.c.bf16 %v273, %v272
  %276 = vrot.lane.b32.xlu0 %v180, 64
  %v277 = vpop.permute.xlu0 %276
  %278 = vrot.lane.b32.xlu0 %v181, 64
  %v279 = vpop.permute.xlu0 %278
  %v282 = vsel %vm228, %v274, 0
  %v285 = vsel %vm228, %v275, 0
  %vm287 = vcmask 1046528
  %v289 = vsel %vm287, %v279, 0
  %291 = vmatpush.bf16.msra.mxu0 0
  %292 = vmatpush.bf16.msra.mxu0 0
  %293 = vmatpush.bf16.msra.mxu0 0
  %294 = vmatpush.bf16.msra.mxu0 0
  %295 = vmatpush.bf16.msra.mxu0 0
  %296 = vmatpush.bf16.msra.mxu0 0
  %297 = vmatpush.bf16.msra.mxu0 %v289
  %298 = vmatpush.bf16.msra.mxu0 %v277
  %299 = vmatmul.bf16.gmra.mxu0 %v282
  %v300 = vpop.f32.mrf.mxu0
  %v301 = vadd.f32 0.0, %v300
  %v302 = vpop.f32.mrf.mxu0
  %v303 = vadd.f32 0.0, %v302
  %304 = vmatmul.bf16.gmra.mxu0 %v285
  %v305 = vpop.f32.mrf.mxu0
  %v306 = vadd.f32 0.0, %v305
  %v307 = vpop.f32.mrf.mxu0
  %v308 = vadd.f32 0.0, %v307
  %309 = vdwg.mxu0
  %v310 = vpack.c.bf16 %v303, %v301
  %v311 = vpack.c.bf16 %v308, %v306
  %312 = vrot.lane.b32.xlu0 %v180, 112
  %v313 = vpop.permute.xlu0 %312
  %314 = vrot.lane.b32.xlu0 %v181, 112
  %v315 = vpop.permute.xlu0 %314
  %316 = vrot.lane.b32.xlu0 %v180, 80
  %v317 = vpop.permute.xlu0 %316
  %318 = vrot.lane.b32.xlu0 %v181, 80
  %v319 = vpop.permute.xlu0 %318
  %v321 = vsel %vm188, %v313, 0
  %v324 = vsel %vm188, %v315, 0
  %v327 = vsel %vm188, %v317, 0
  %v330 = vsel %vm188, %v319, 0
  %332 = vmatpush.bf16.xpose.msra.mxu0 0
  %333 = vmatpush.bf16.xpose.msra.mxu0 0
  %334 = vmatpush.bf16.xpose.msra.mxu0 0
  %335 = vmatpush.bf16.xpose.msra.mxu0 0
  %336 = vmatpush.bf16.xpose.msra.mxu0 0
  %337 = vmatpush.bf16.xpose.msra.mxu0 0
  %338 = vmatpush.bf16.xpose.msra.mxu0 %v330
  %339 = vmatpush.bf16.xpose.msra.mxu0 %v327
  %340 = vmatmul.bf16.gmra.mxu0 %v321
  %v341 = vpop.f32.mrf.mxu0
  %v342 = vadd.f32 0.0, %v341
  %v343 = vpop.f32.mrf.mxu0
  %v344 = vadd.f32 0.0, %v343
  %345 = vmatmul.bf16.gmra.mxu0 %v324
  %v346 = vpop.f32.mrf.mxu0
  %v347 = vadd.f32 0.0, %v346
  %v348 = vpop.f32.mrf.mxu0
  %v349 = vadd.f32 0.0, %v348
  %350 = vdwg.mxu0
  %v351 = vmul.f32 %v342, 0.25
  %v352 = vmul.f32 %v344, 0.25
  %v353 = vmul.f32 %v347, 0.25
  %v354 = vmul.f32 %v349, 0.25
  %v355 = vadd.f32 %v351, %v18
  %v356 = vadd.f32 %v352, %v19
  %v357 = vadd.f32 %v353, %v20
  %v358 = vadd.f32 %v354, %v21
  %v359 = vsel %vm228, %v355, -inf
  %360 = vmax.xlane.f32.xlu0 %v359
  %v361 = vpop.xlane.xlu0 %360
  %v362 = vsel %vm228, %v356, -inf
  %363 = vmax.xlane.f32.xlu0 %v362
  %v364 = vpop.xlane.xlu0 %363
  %v365 = vsel %vm228, %v357, -inf
  %366 = vmax.xlane.f32.xlu0 %v365
  %v367 = vpop.xlane.xlu0 %366
  %v368 = vsel %vm238, %v358, -inf
  %369 = vmax.xlane.f32.xlu0 %v368
  %v370 = vpop.xlane.xlu0 %369
  %v371 = vsub.f32 %v355, %v361
  %v372 = vsub.f32 %v356, %v364
  %v373 = vsub.f32 %v357, %v367
  %v374 = vsub.f32 %v358, %v370
  %v375 = vmul.f32 %v371, 1.442695
  %v376 = vpow.pop %v375
  %v377 = vmul.f32 %v372, 1.442695
  %v378 = vpow.pop %v377
  %v379 = vmul.f32 %v373, 1.442695
  %v380 = vpow.pop %v379
  %v381 = vmul.f32 %v374, 1.442695
  %v382 = vpow.pop %v381
  %v383 = vsel %vm228, %v376, 0.0
  %384 = vadd.xlane.f32.xlu0 %v383
  %v385 = vpop.xlane.xlu0 %384
  %v386 = vsel %vm228, %v378, 0.0
  %387 = vadd.xlane.f32.xlu0 %v386
  %v388 = vpop.xlane.xlu0 %387
  %v389 = vsel %vm228, %v380, 0.0
  %390 = vadd.xlane.f32.xlu0 %v389
  %v391 = vpop.xlane.xlu0 %390
  %v392 = vsel %vm238, %v382, 0.0
  %393 = vadd.xlane.f32.xlu0 %v392
  %v394 = vpop.xlane.xlu0 %393
  %v395 = vrcp.pop %v385
  %v396 = vrcp.pop %v388
  %v397 = vrcp.pop %v391
  %v398 = vrcp.pop %v394
  %v399 = vmul.f32 %v376, %v395
  %v400 = vmul.f32 %v378, %v396
  %v401 = vmul.f32 %v380, %v397
  %v402 = vmul.f32 %v382, %v398
  %v403 = vpack.c.bf16 %v400, %v399
  %v404 = vpack.c.bf16 %v402, %v401
  %405 = vrot.lane.b32.xlu0 %v180, 48
  %v406 = vpop.permute.xlu0 %405
  %407 = vrot.lane.b32.xlu0 %v181, 48
  %v408 = vpop.permute.xlu0 %407
  %v411 = vsel %vm228, %v403, 0
  %v414 = vsel %vm228, %v404, 0
  %v417 = vsel %vm287, %v408, 0
  %419 = vmatpush.bf16.msra.mxu0 0
  %420 = vmatpush.bf16.msra.mxu0 0
  %421 = vmatpush.bf16.msra.mxu0 0
  %422 = vmatpush.bf16.msra.mxu0 0
  %423 = vmatpush.bf16.msra.mxu0 0
  %424 = vmatpush.bf16.msra.mxu0 0
  %425 = vmatpush.bf16.msra.mxu0 %v417
  %426 = vmatpush.bf16.msra.mxu0 %v406
  %427 = vmatmul.bf16.gmra.mxu0 %v411
  %v428 = vpop.f32.mrf.mxu0
  %v429 = vadd.f32 0.0, %v428
  %v430 = vpop.f32.mrf.mxu0
  %v431 = vadd.f32 0.0, %v430
  %432 = vmatmul.bf16.gmra.mxu0 %v414
  %v433 = vpop.f32.mrf.mxu0
  %v434 = vadd.f32 0.0, %v433
  %v435 = vpop.f32.mrf.mxu0
  %v436 = vadd.f32 0.0, %v435
  %437 = vdwg.mxu0
  %v438 = vpack.c.bf16 %v431, %v429
  %v439 = vpack.c.bf16 %v436, %v434
  %440 = vrot.lane.b32.xlu0 %v151, 32
  %v441 = vpop.permute.xlu0 %440
  %v444 = vsel %vm188, %v438, 0
  %v447 = vsel %vm188, %v439, 0
  %449 = vmatpush.bf16.msra.mxu0 0
  %450 = vmatpush.bf16.msra.mxu0 0
  %451 = vmatpush.bf16.msra.mxu0 0
  %452 = vmatpush.bf16.msra.mxu0 0
  %453 = vmatpush.bf16.msra.mxu0 0
  %454 = vmatpush.bf16.msra.mxu0 0
  %455 = vmatpush.bf16.msra.mxu0 0
  %456 = vmatpush.bf16.msra.mxu0 %v441
  %457 = vmatmul.bf16.gmra.mxu0 %v444
  %v458 = vpop.f32.mrf.mxu0
  %v459 = vadd.f32 0.0, %v458
  %v460 = vpop.f32.mrf.mxu0
  %v461 = vadd.f32 0.0, %v460
  %462 = vmatmul.bf16.gmra.mxu0 %v447
  %v463 = vpop.f32.mrf.mxu0
  %v464 = vadd.f32 0.0, %v463
  %v465 = vpop.f32.mrf.mxu0
  %v466 = vadd.f32 0.0, %v465
  %467 = vdwg.mxu0
  %468 = vrot.lane.b32.xlu0 %v150, 32
  %v469 = vpop.permute.xlu0 %468
  %v472 = vsel %vm188, %v310, 0
  %v475 = vsel %vm188, %v311, 0
  %477 = vmatpush.bf16.msra.mxu0 0
  %478 = vmatpush.bf16.msra.mxu0 0
  %479 = vmatpush.bf16.msra.mxu0 0
  %480 = vmatpush.bf16.msra.mxu0 0
  %481 = vmatpush.bf16.msra.mxu0 0
  %482 = vmatpush.bf16.msra.mxu0 0
  %483 = vmatpush.bf16.msra.mxu0 0
  %484 = vmatpush.bf16.msra.mxu0 %v469
  %485 = vmatmul.bf16.gmra.mxu0 %v472
  %v486 = vpop.f32.mrf.mxu0
  %v487 = vadd.f32 %v459, %v486
  %v488 = vpop.f32.mrf.mxu0
  %v489 = vadd.f32 %v461, %v488
  %490 = vmatmul.bf16.gmra.mxu0 %v475
  %v491 = vpop.f32.mrf.mxu0
  %v492 = vadd.f32 %v464, %v491
  %v493 = vpop.f32.mrf.mxu0
  %v494 = vadd.f32 %v466, %v493
  %495 = vdwg.mxu0
  %497 = vrot.lane.b32.xlu0 %v141, 32
  %v498 = vpop.permute.xlu0 %497
  %v500 = vadd.f32 %v487, %v498
  %v501 = vadd.f32 %v489, %v498
  %v502 = vadd.f32 %v492, %v498
  %v503 = vadd.f32 %v494, %v498
  %v504 = vadd.f32 %v115, %v500
  %v505 = vadd.f32 %v117, %v501
  %v506 = vadd.f32 %v120, %v502
  %v507 = vadd.f32 %v122, %v503
  %v508 = vld [vmem:[%s3 + $0x7] sm:$0x1]
  %v509 = vld [vmem:[%s3 + $0xc] sm:$0x1]
  %v510 = vsel %vm154, %v504, 0.0
  %511 = vadd.xlane.f32.xlu0 %v510
  %v512 = vpop.xlane.xlu0 %511
  %v513 = vsel %vm154, %v505, 0.0
  %514 = vadd.xlane.f32.xlu0 %v513
  %v515 = vpop.xlane.xlu0 %514
  %v516 = vsel %vm154, %v506, 0.0
  %517 = vadd.xlane.f32.xlu0 %v516
  %v518 = vpop.xlane.xlu0 %517
  %vm519 = vcmask 259072
  %v520 = vsel %vm519, %v507, 0.0
  %521 = vadd.xlane.f32.xlu0 %v520
  %v522 = vpop.xlane.xlu0 %521
  %v523 = vrcp.pop 32.0
  %v524 = vmul.f32 32.0, %v523
  %v525 = vsub.f32 1.0, %v524
  %v526 = vmul.f32 %v523, %v525
  %v527 = vadd.f32 %v523, %v526
  %vm528 = vweird.f32 %v523
  %v529 = vsel %vm528, %v523, %v527
  %v530 = vmul.f32 %v512, %v529
  %v531 = vmul.f32 %v515, %v529
  %v532 = vmul.f32 %v518, %v529
  %v533 = vmul.f32 %v522, %v529
  %v534 = vmul.f32 %v504, %v504
  %v535 = vmul.f32 %v505, %v505
  %v536 = vmul.f32 %v506, %v506
  %v537 = vmul.f32 %v507, %v507
  %v538 = vsel %vm154, %v534, 0.0
  %539 = vadd.xlane.f32.xlu0 %v538
  %v540 = vpop.xlane.xlu0 %539
  %v541 = vsel %vm154, %v535, 0.0
  %542 = vadd.xlane.f32.xlu0 %v541
  %v543 = vpop.xlane.xlu0 %542
  %v544 = vsel %vm154, %v536, 0.0
  %545 = vadd.xlane.f32.xlu0 %v544
  %v546 = vpop.xlane.xlu0 %545
  %v547 = vsel %vm519, %v537, 0.0
  %548 = vadd.xlane.f32.xlu0 %v547
  %v549 = vpop.xlane.xlu0 %548
  %v550 = vmul.f32 %v540, %v529
  %v551 = vmul.f32 %v543, %v529
  %v552 = vmul.f32 %v546, %v529
  %v553 = vmul.f32 %v549, %v529
  %v554 = vmul.f32 %v530, %v530
  %v555 = vmul.f32 %v531, %v531
  %v556 = vmul.f32 %v532, %v532
  %v557 = vmul.f32 %v533, %v533
  %v558 = vsub.f32 %v550, %v554
  %v559 = vsub.f32 %v551, %v555
  %v560 = vsub.f32 %v552, %v556
  %v561 = vsub.f32 %v553, %v557
  %v562 = vmax.f32 %v558, 0.0
  %v563 = vmax.f32 %v559, 0.0
  %v564 = vmax.f32 %v560, 0.0
  %v565 = vmax.f32 %v561, 0.0
  %v566 = vsub.f32 %v504, %v530
  %v567 = vsub.f32 %v505, %v531
  %v568 = vsub.f32 %v506, %v532
  %v569 = vsub.f32 %v507, %v533
  %v570 = vadd.f32 %v562, 1e-05
  %v571 = vadd.f32 %v563, 1e-05
  %v572 = vadd.f32 %v564, 1e-05
  %v573 = vadd.f32 %v565, 1e-05
  %v574 = vrsqrt.pop %v570
  %v575 = vmul.f32 %v574, %v570
  %v576 = vmul.f32 %v575, %v574
  %v577 = vmul.f32 0.5, %v576
  %v578 = vsub.f32 1.5, %v577
  %v579 = vmul.f32 %v574, %v578
  %vm580 = vweird.f32 %v570
  %vm581 = vweird.f32 %v574
  %vm582 = vmor %vm580, %vm581
  %v583 = vsel %vm582, %v574, %v579
  %v584 = vrsqrt.pop %v571
  %v585 = vmul.f32 %v584, %v571
  %v586 = vmul.f32 %v585, %v584
  %v587 = vmul.f32 0.5, %v586
  %v588 = vsub.f32 1.5, %v587
  %v589 = vmul.f32 %v584, %v588
  %vm590 = vweird.f32 %v571
  %vm591 = vweird.f32 %v584
  %vm592 = vmor %vm590, %vm591
  %v593 = vsel %vm592, %v584, %v589
  %v594 = vrsqrt.pop %v572
  %v595 = vmul.f32 %v594, %v572
  %v596 = vmul.f32 %v595, %v594
  %v597 = vmul.f32 0.5, %v596
  %v598 = vsub.f32 1.5, %v597
  %v599 = vmul.f32 %v594, %v598
  %vm600 = vweird.f32 %v572
  %vm601 = vweird.f32 %v594
  %vm602 = vmor %vm600, %vm601
  %v603 = vsel %vm602, %v594, %v599
  %v604 = vrsqrt.pop %v573
  %v605 = vmul.f32 %v604, %v573
  %v606 = vmul.f32 %v605, %v604
  %v607 = vmul.f32 0.5, %v606
  %v608 = vsub.f32 1.5, %v607
  %v609 = vmul.f32 %v604, %v608
  %vm610 = vweird.f32 %v573
  %vm611 = vweird.f32 %v604
  %vm612 = vmor %vm610, %vm611
  %v613 = vsel %vm612, %v604, %v609
  %v614 = vmul.f32 %v566, %v583
  %v615 = vmul.f32 %v567, %v593
  %v616 = vmul.f32 %v568, %v603
  %v617 = vmul.f32 %v569, %v613
  %v618 = vperm.slane %v508, 0
  %v619 = vmul.f32 %v614, %v618
  %v620 = vmul.f32 %v615, %v618
  %v621 = vmul.f32 %v616, %v618
  %v622 = vmul.f32 %v617, %v618
  %v623 = vperm.slane %v509, 0
  %v624 = vadd.f32 %v619, %v623
  %v625 = vadd.f32 %v620, %v623
  %v626 = vadd.f32 %v621, %v623
  %v627 = vadd.f32 %v622, %v623
  %v628 = vpack.c.bf16 %v625, %v624
  %v629 = vpack.c.bf16 %v627, %v626
  %v630 = vld [vmem:[%s1 + $0x10] sm:$0xf]
  %v631 = vld [vmem:[%s1 + $0x28] sm:$0xf]
  %v632 = vld [vmem:[%s1 + $0x40] sm:$0xf]
  %v633 = vld [vmem:[%s1 + $0x58] sm:$0xf]
  %v634 = vld [vmem:[%s3 + $0x3] sm:$0x1]
  %v635 = vperm.slane %v634, 0
  %v640 = vunpack.c.l.b16 %v630
  %v641 = vunpack.c.l.b16 %v631
  %v642 = vunpack.c.l.b16 %v632
  %v643 = vunpack.c.l.b16 %v633
  %v644 = vpack.c.b16 %v641, %v640
  %v645 = vpack.c.b16 %v643, %v642
  %v649 = vsel %vm154, %v628, 0
  %v652 = vsel %vm154, %v629, 0
  %654 = vmatpush.bf16.msra.mxu0 0
  %655 = vmatpush.bf16.msra.mxu0 0
  %656 = vmatpush.bf16.msra.mxu0 0
  %657 = vmatpush.bf16.msra.mxu0 0
  %658 = vmatpush.bf16.msra.mxu0 0
  %659 = vmatpush.bf16.msra.mxu0 0
  %660 = vmatpush.bf16.msra.mxu0 %v645
  %661 = vmatpush.bf16.msra.mxu0 %v644
  %662 = vmatmul.bf16.gmra.mxu0 %v649
  %v663 = vpop.f32.mrf.mxu0
  %v664 = vadd.f32 %v635, %v663
  %v665 = vpop.f32.mrf.mxu0
  %v666 = vadd.f32 %v635, %v665
  %667 = vmatmul.bf16.gmra.mxu0 %v652
  %v668 = vpop.f32.mrf.mxu0
  %v669 = vadd.f32 %v635, %v668
  %v670 = vpop.f32.mrf.mxu0
  %v671 = vadd.f32 %v635, %v670
  %672 = vdwg.mxu0
  %v673 = vmax.f32 %v664, 0.0
  %v674 = vmax.f32 %v666, 0.0
  %v675 = vmax.f32 %v669, 0.0
  %v676 = vmax.f32 %v671, 0.0
  %v677 = vpack.c.bf16 %v674, %v673
  %v678 = vpack.c.bf16 %v676, %v675
  %v679 = vld [vmem:[%s2] sm:$0xf]
  %v680 = vld [vmem:[%s2 + $0x4] sm:$0xf]
  %v681 = vld [vmem:[%s2 + $0x8] sm:$0xf]
  %v682 = vld [vmem:[%s2 + $0xc] sm:$0xf]
  %v683 = vld [vmem:[%s2 + $0x10] sm:$0xf]
  %v684 = vld [vmem:[%s2 + $0x14] sm:$0xf]
  %v685 = vld [vmem:[%s2 + $0x18] sm:$0xf]
  %v686 = vld [vmem:[%s2 + $0x1c] sm:$0xf]
  %v687 = vld [vmem:[%s2 + $0x20] sm:$0xf]
  %v688 = vld [vmem:[%s2 + $0x24] sm:$0xf]
  %v689 = vld [vmem:[%s2 + $0x28] sm:$0xf]
  %v690 = vld [vmem:[%s2 + $0x2c] sm:$0xf]
  %v691 = vld [vmem:[%s2 + $0x30] sm:$0xf]
  %v692 = vld [vmem:[%s2 + $0x34] sm:$0xf]
  %v693 = vld [vmem:[%s2 + $0x38] sm:$0xf]
  %v694 = vld [vmem:[%s2 + $0x3c] sm:$0xf]
  %v695 = vld [vmem:[%s3 + $0x5] sm:$0x1]
  %v696 = vperm.slane %v695, 0
  %v713 = vunpack.c.l.b16 %v679
  %v714 = vunpack.c.l.b16 %v680
  %v715 = vunpack.c.l.b16 %v681
  %v716 = vunpack.c.l.b16 %v682
  %v717 = vunpack.c.l.b16 %v683
  %v718 = vunpack.c.l.b16 %v684
  %v719 = vunpack.c.l.b16 %v685
  %v720 = vunpack.c.l.b16 %v686
  %v721 = vunpack.c.l.b16 %v687
  %v722 = vunpack.c.l.b16 %v688
  %v723 = vunpack.c.l.b16 %v689
  %v724 = vunpack.c.l.b16 %v690
  %v725 = vunpack.c.l.b16 %v691
  %v726 = vunpack.c.l.b16 %v692
  %v727 = vunpack.c.l.b16 %v693
  %v728 = vunpack.c.l.b16 %v694
  %v729 = vpack.c.b16 %v714, %v713
  %v730 = vpack.c.b16 %v716, %v715
  %v731 = vpack.c.b16 %v718, %v717
  %v732 = vpack.c.b16 %v720, %v719
  %v733 = vpack.c.b16 %v722, %v721
  %v734 = vpack.c.b16 %v724, %v723
  %v735 = vpack.c.b16 %v726, %v725
  %v736 = vpack.c.b16 %v728, %v727
  %745 = vmatpush.bf16.msra.mxu0 %v736
  %746 = vmatpush.bf16.msra.mxu0 %v735
  %747 = vmatpush.bf16.msra.mxu0 %v734
  %748 = vmatpush.bf16.msra.mxu0 %v733
  %749 = vmatpush.bf16.msra.mxu0 %v732
  %750 = vmatpush.bf16.msra.mxu0 %v731
  %751 = vmatpush.bf16.msra.mxu0 %v730
  %752 = vmatpush.bf16.msra.mxu0 %v729
  %753 = vmatmul.bf16.gmra.mxu0 %v677
  %v754 = vpop.f32.mrf.mxu0
  %v755 = vadd.f32 %v696, %v754
  %v756 = vpop.f32.mrf.mxu0
  %v757 = vadd.f32 %v696, %v756
  %758 = vmatmul.bf16.gmra.mxu0 %v678
  %v759 = vpop.f32.mrf.mxu0
  %v760 = vadd.f32 %v696, %v759
  %v761 = vpop.f32.mrf.mxu0
  %v762 = vadd.f32 %v696, %v761
  %763 = vdwg.mxu0
  %v764 = vadd.f32 %v624, %v755
  %v765 = vadd.f32 %v625, %v757
  %v766 = vadd.f32 %v626, %v760
  %v767 = vadd.f32 %v627, %v762
  %v768 = vld [vmem:[%s3 + $0x8] sm:$0x1]
  %v769 = vld [vmem:[%s3 + $0xd] sm:$0x1]
  %v770 = vsel %vm154, %v764, 0.0
  %771 = vadd.xlane.f32.xlu0 %v770
  %v772 = vpop.xlane.xlu0 %771
  %v773 = vsel %vm154, %v765, 0.0
  %774 = vadd.xlane.f32.xlu0 %v773
  %v775 = vpop.xlane.xlu0 %774
  %v776 = vsel %vm154, %v766, 0.0
  %777 = vadd.xlane.f32.xlu0 %v776
  %v778 = vpop.xlane.xlu0 %777
  %v779 = vsel %vm519, %v767, 0.0
  %780 = vadd.xlane.f32.xlu0 %v779
  %v781 = vpop.xlane.xlu0 %780
  %v782 = vmul.f32 %v772, %v529
  %v783 = vmul.f32 %v775, %v529
  %v784 = vmul.f32 %v778, %v529
  %v785 = vmul.f32 %v781, %v529
  %v786 = vmul.f32 %v764, %v764
  %v787 = vmul.f32 %v765, %v765
  %v788 = vmul.f32 %v766, %v766
  %v789 = vmul.f32 %v767, %v767
  %v790 = vsel %vm154, %v786, 0.0
  %791 = vadd.xlane.f32.xlu0 %v790
  %v792 = vpop.xlane.xlu0 %791
  %v793 = vsel %vm154, %v787, 0.0
  %794 = vadd.xlane.f32.xlu0 %v793
  %v795 = vpop.xlane.xlu0 %794
  %v796 = vsel %vm154, %v788, 0.0
  %797 = vadd.xlane.f32.xlu0 %v796
  %v798 = vpop.xlane.xlu0 %797
  %v799 = vsel %vm519, %v789, 0.0
  %800 = vadd.xlane.f32.xlu0 %v799
  %v801 = vpop.xlane.xlu0 %800
  %v802 = vmul.f32 %v792, %v529
  %v803 = vmul.f32 %v795, %v529
  %v804 = vmul.f32 %v798, %v529
  %v805 = vmul.f32 %v801, %v529
  %v806 = vmul.f32 %v782, %v782
  %v807 = vmul.f32 %v783, %v783
  %v808 = vmul.f32 %v784, %v784
  %v809 = vmul.f32 %v785, %v785
  %v810 = vsub.f32 %v802, %v806
  %v811 = vsub.f32 %v803, %v807
  %v812 = vsub.f32 %v804, %v808
  %v813 = vsub.f32 %v805, %v809
  %v814 = vmax.f32 %v810, 0.0
  %v815 = vmax.f32 %v811, 0.0
  %v816 = vmax.f32 %v812, 0.0
  %v817 = vmax.f32 %v813, 0.0
  %v818 = vsub.f32 %v764, %v782
  %v819 = vsub.f32 %v765, %v783
  %v820 = vsub.f32 %v766, %v784
  %v821 = vsub.f32 %v767, %v785
  %v822 = vadd.f32 %v814, 1e-05
  %v823 = vadd.f32 %v815, 1e-05
  %v824 = vadd.f32 %v816, 1e-05
  %v825 = vadd.f32 %v817, 1e-05
  %v826 = vrsqrt.pop %v822
  %v827 = vmul.f32 %v826, %v822
  %v828 = vmul.f32 %v827, %v826
  %v829 = vmul.f32 0.5, %v828
  %v830 = vsub.f32 1.5, %v829
  %v831 = vmul.f32 %v826, %v830
  %vm832 = vweird.f32 %v822
  %vm833 = vweird.f32 %v826
  %vm834 = vmor %vm832, %vm833
  %v835 = vsel %vm834, %v826, %v831
  %v836 = vrsqrt.pop %v823
  %v837 = vmul.f32 %v836, %v823
  %v838 = vmul.f32 %v837, %v836
  %v839 = vmul.f32 0.5, %v838
  %v840 = vsub.f32 1.5, %v839
  %v841 = vmul.f32 %v836, %v840
  %vm842 = vweird.f32 %v823
  %vm843 = vweird.f32 %v836
  %vm844 = vmor %vm842, %vm843
  %v845 = vsel %vm844, %v836, %v841
  %v846 = vrsqrt.pop %v824
  %v847 = vmul.f32 %v846, %v824
  %v848 = vmul.f32 %v847, %v846
  %v849 = vmul.f32 0.5, %v848
  %v850 = vsub.f32 1.5, %v849
  %v851 = vmul.f32 %v846, %v850
  %vm852 = vweird.f32 %v824
  %vm853 = vweird.f32 %v846
  %vm854 = vmor %vm852, %vm853
  %v855 = vsel %vm854, %v846, %v851
  %v856 = vrsqrt.pop %v825
  %v857 = vmul.f32 %v856, %v825
  %v858 = vmul.f32 %v857, %v856
  %v859 = vmul.f32 0.5, %v858
  %v860 = vsub.f32 1.5, %v859
  %v861 = vmul.f32 %v856, %v860
  %vm862 = vweird.f32 %v825
  %vm863 = vweird.f32 %v856
  %vm864 = vmor %vm862, %vm863
  %v865 = vsel %vm864, %v856, %v861
  %v866 = vmul.f32 %v818, %v835
  %v867 = vmul.f32 %v819, %v845
  %v868 = vmul.f32 %v820, %v855
  %v869 = vmul.f32 %v821, %v865
  %v870 = vperm.slane %v768, 0
  %v871 = vmul.f32 %v866, %v870
  %v872 = vmul.f32 %v867, %v870
  %v873 = vmul.f32 %v868, %v870
  %v874 = vmul.f32 %v869, %v870
  %v875 = vperm.slane %v769, 0
  %v876 = vadd.f32 %v871, %v875
  %v877 = vadd.f32 %v872, %v875
  %v878 = vadd.f32 %v873, %v875
  %v879 = vadd.f32 %v874, %v875
  %v880 = vld [vmem:[%s1 + $0x8] sm:$0xf]
  %v881 = vld [vmem:[%s1 + $0x20] sm:$0xf]
  %v882 = vld [vmem:[%s1 + $0x38] sm:$0xf]
  %v883 = vld [vmem:[%s1 + $0x50] sm:$0xf]
  %v884 = vld [vmem:[%s3 + $0x1] sm:$0x1]
  %v885 = vpack.c.bf16 %v127, %v125
  %v886 = vpack.c.bf16 %v132, %v130
  %v887 = vperm.slane %v884, 0
  %v892 = vunpack.c.l.b16 %v880
  %v893 = vunpack.c.l.b16 %v881
  %v894 = vunpack.c.l.b16 %v882
  %v895 = vunpack.c.l.b16 %v883
  %v896 = vpack.c.b16 %v893, %v892
  %v897 = vpack.c.b16 %v895, %v894
  %v901 = vsel %vm154, %v885, 0
  %v904 = vsel %vm154, %v886, 0
  %906 = vmatpush.bf16.msra.mxu0 0
  %907 = vmatpush.bf16.msra.mxu0 0
  %908 = vmatpush.bf16.msra.mxu0 0
  %909 = vmatpush.bf16.msra.mxu0 0
  %910 = vmatpush.bf16.msra.mxu0 0
  %911 = vmatpush.bf16.msra.mxu0 0
  %912 = vmatpush.bf16.msra.mxu0 %v897
  %913 = vmatpush.bf16.msra.mxu0 %v896
  %914 = vmatmul.bf16.gmra.mxu0 %v901
  %v915 = vpop.f32.mrf.mxu0
  %v916 = vadd.f32 %v887, %v915
  %v917 = vpop.f32.mrf.mxu0
  %v918 = vadd.f32 %v887, %v917
  %919 = vmatmul.bf16.gmra.mxu0 %v904
  %v920 = vpop.f32.mrf.mxu0
  %v921 = vadd.f32 %v887, %v920
  %v922 = vpop.f32.mrf.mxu0
  %v923 = vadd.f32 %v887, %v922
  %924 = vdwg.mxu0
  %v925 = vpack.c.bf16 %v918, %v916
  %v926 = vpack.c.bf16 %v923, %v921
  %929 = vrot.lane.b32.xlu0 %v925, 96
  %v930 = vpop.permute.xlu0 %929
  %931 = vrot.lane.b32.xlu0 %v926, 96
  %v932 = vpop.permute.xlu0 %931
  %v934 = vsel %vm188, %v925, 0
  %v937 = vsel %vm188, %v926, 0
  %v940 = vsel %vm188, %v930, 0
  %v943 = vsel %vm188, %v932, 0
  %945 = vmatpush.bf16.xpose.msra.mxu0 0
  %946 = vmatpush.bf16.xpose.msra.mxu0 0
  %947 = vmatpush.bf16.xpose.msra.mxu0 0
  %948 = vmatpush.bf16.xpose.msra.mxu0 0
  %949 = vmatpush.bf16.xpose.msra.mxu0 0
  %950 = vmatpush.bf16.xpose.msra.mxu0 0
  %951 = vmatpush.bf16.xpose.msra.mxu0 %v943
  %952 = vmatpush.bf16.xpose.msra.mxu0 %v940
  %953 = vmatmul.bf16.gmra.mxu0 %v934
  %v954 = vpop.f32.mrf.mxu0
  %v955 = vadd.f32 0.0, %v954
  %v956 = vpop.f32.mrf.mxu0
  %v957 = vadd.f32 0.0, %v956
  %958 = vmatmul.bf16.gmra.mxu0 %v937
  %v959 = vpop.f32.mrf.mxu0
  %v960 = vadd.f32 0.0, %v959
  %v961 = vpop.f32.mrf.mxu0
  %v962 = vadd.f32 0.0, %v961
  %963 = vdwg.mxu0
  %v964 = vmul.f32 %v955, 0.25
  %v965 = vmul.f32 %v957, 0.25
  %v966 = vmul.f32 %v960, 0.25
  %v967 = vmul.f32 %v962, 0.25
  %v968 = vadd.f32 %v964, %v22
  %v969 = vadd.f32 %v965, %v23
  %v970 = vadd.f32 %v966, %v24
  %v971 = vadd.f32 %v967, %v25
  %vm972 = vcmask 228352
  %v973 = vsel %vm972, %v968, -inf
  %974 = vmax.xlane.f32.xlu0 %v973
  %v975 = vpop.xlane.xlu0 %974
  %v976 = vsel %vm972, %v969, -inf
  %977 = vmax.xlane.f32.xlu0 %v976
  %v978 = vpop.xlane.xlu0 %977
  %v979 = vsel %vm972, %v970, -inf
  %980 = vmax.xlane.f32.xlu0 %v979
  %v981 = vpop.xlane.xlu0 %980
  %vm982 = vcmask 224256
  %v983 = vsel %vm982, %v971, -inf
  %984 = vmax.xlane.f32.xlu0 %v983
  %v985 = vpop.xlane.xlu0 %984
  %v986 = vsub.f32 %v968, %v975
  %v987 = vsub.f32 %v969, %v978
  %v988 = vsub.f32 %v970, %v981
  %v989 = vsub.f32 %v971, %v985
  %v990 = vmul.f32 %v986, 1.442695
  %v991 = vpow.pop %v990
  %v992 = vmul.f32 %v987, 1.442695
  %v993 = vpow.pop %v992
  %v994 = vmul.f32 %v988, 1.442695
  %v995 = vpow.pop %v994
  %v996 = vmul.f32 %v989, 1.442695
  %v997 = vpow.pop %v996
  %v998 = vsel %vm972, %v991, 0.0
  %999 = vadd.xlane.f32.xlu0 %v998
  %v1000 = vpop.xlane.xlu0 %999
  %v1001 = vsel %vm972, %v993, 0.0
  %1002 = vadd.xlane.f32.xlu0 %v1001
  %v1003 = vpop.xlane.xlu0 %1002
  %v1004 = vsel %vm972, %v995, 0.0
  %1005 = vadd.xlane.f32.xlu0 %v1004
  %v1006 = vpop.xlane.xlu0 %1005
  %v1007 = vsel %vm982, %v997, 0.0
  %1008 = vadd.xlane.f32.xlu0 %v1007
  %v1009 = vpop.xlane.xlu0 %1008
  %v1010 = vrcp.pop %v1000
  %v1011 = vrcp.pop %v1003
  %v1012 = vrcp.pop %v1006
  %v1013 = vrcp.pop %v1009
  %v1014 = vmul.f32 %v991, %v1010
  %v1015 = vmul.f32 %v993, %v1011
  %v1016 = vmul.f32 %v995, %v1012
  %v1017 = vmul.f32 %v997, %v1013
  %v1018 = vpack.c.bf16 %v1015, %v1014
  %v1019 = vpack.c.bf16 %v1017, %v1016
  %1020 = vrot.lane.b32.xlu0 %v925, 64
  %v1021 = vpop.permute.xlu0 %1020
  %1022 = vrot.lane.b32.xlu0 %v926, 64
  %v1023 = vpop.permute.xlu0 %1022
  %v1026 = vsel %vm972, %v1018, 0
  %v1029 = vsel %vm972, %v1019, 0
  %vm1031 = vcmask 1045504
  %v1033 = vsel %vm1031, %v1023, 0
  %1035 = vmatpush.bf16.msra.mxu0 0
  %1036 = vmatpush.bf16.msra.mxu0 0
  %1037 = vmatpush.bf16.msra.mxu0 0
  %1038 = vmatpush.bf16.msra.mxu0 0
  %1039 = vmatpush.bf16.msra.mxu0 0
  %1040 = vmatpush.bf16.msra.mxu0 0
  %1041 = vmatpush.bf16.msra.mxu0 %v1033
  %1042 = vmatpush.bf16.msra.mxu0 %v1021
  %1043 = vmatmul.bf16.gmra.mxu0 %v1026
  %v1044 = vpop.f32.mrf.mxu0
  %v1045 = vadd.f32 0.0, %v1044
  %v1046 = vpop.f32.mrf.mxu0
  %v1047 = vadd.f32 0.0, %v1046
  %1048 = vmatmul.bf16.gmra.mxu0 %v1029
  %v1049 = vpop.f32.mrf.mxu0
  %v1050 = vadd.f32 0.0, %v1049
  %v1051 = vpop.f32.mrf.mxu0
  %v1052 = vadd.f32 0.0, %v1051
  %1053 = vdwg.mxu0
  %v1054 = vpack.c.bf16 %v1047, %v1045
  %v1055 = vpack.c.bf16 %v1052, %v1050
  %1056 = vrot.lane.b32.xlu0 %v925, 112
  %v1057 = vpop.permute.xlu0 %1056
  %1058 = vrot.lane.b32.xlu0 %v926, 112
  %v1059 = vpop.permute.xlu0 %1058
  %1060 = vrot.lane.b32.xlu0 %v925, 80
  %v1061 = vpop.permute.xlu0 %1060
  %1062 = vrot.lane.b32.xlu0 %v926, 80
  %v1063 = vpop.permute.xlu0 %1062
  %v1065 = vsel %vm188, %v1057, 0
  %v1068 = vsel %vm188, %v1059, 0
  %v1071 = vsel %vm188, %v1061, 0
  %v1074 = vsel %vm188, %v1063, 0
  %1076 = vmatpush.bf16.xpose.msra.mxu0 0
  %1077 = vmatpush.bf16.xpose.msra.mxu0 0
  %1078 = vmatpush.bf16.xpose.msra.mxu0 0
  %1079 = vmatpush.bf16.xpose.msra.mxu0 0
  %1080 = vmatpush.bf16.xpose.msra.mxu0 0
  %1081 = vmatpush.bf16.xpose.msra.mxu0 0
  %1082 = vmatpush.bf16.xpose.msra.mxu0 %v1074
  %1083 = vmatpush.bf16.xpose.msra.mxu0 %v1071
  %1084 = vmatmul.bf16.gmra.mxu0 %v1065
  %v1085 = vpop.f32.mrf.mxu0
  %v1086 = vadd.f32 0.0, %v1085
  %v1087 = vpop.f32.mrf.mxu0
  %v1088 = vadd.f32 0.0, %v1087
  %1089 = vmatmul.bf16.gmra.mxu0 %v1068
  %v1090 = vpop.f32.mrf.mxu0
  %v1091 = vadd.f32 0.0, %v1090
  %v1092 = vpop.f32.mrf.mxu0
  %v1093 = vadd.f32 0.0, %v1092
  %1094 = vdwg.mxu0
  %v1095 = vmul.f32 %v1086, 0.25
  %v1096 = vmul.f32 %v1088, 0.25
  %v1097 = vmul.f32 %v1091, 0.25
  %v1098 = vmul.f32 %v1093, 0.25
  %v1099 = vadd.f32 %v1095, %v22
  %v1100 = vadd.f32 %v1096, %v23
  %v1101 = vadd.f32 %v1097, %v24
  %v1102 = vadd.f32 %v1098, %v25
  %v1103 = vsel %vm972, %v1099, -inf
  %1104 = vmax.xlane.f32.xlu0 %v1103
  %v1105 = vpop.xlane.xlu0 %1104
  %v1106 = vsel %vm972, %v1100, -inf
  %1107 = vmax.xlane.f32.xlu0 %v1106
  %v1108 = vpop.xlane.xlu0 %1107
  %v1109 = vsel %vm972, %v1101, -inf
  %1110 = vmax.xlane.f32.xlu0 %v1109
  %v1111 = vpop.xlane.xlu0 %1110
  %v1112 = vsel %vm982, %v1102, -inf
  %1113 = vmax.xlane.f32.xlu0 %v1112
  %v1114 = vpop.xlane.xlu0 %1113
  %v1115 = vsub.f32 %v1099, %v1105
  %v1116 = vsub.f32 %v1100, %v1108
  %v1117 = vsub.f32 %v1101, %v1111
  %v1118 = vsub.f32 %v1102, %v1114
  %v1119 = vmul.f32 %v1115, 1.442695
  %v1120 = vpow.pop %v1119
  %v1121 = vmul.f32 %v1116, 1.442695
  %v1122 = vpow.pop %v1121
  %v1123 = vmul.f32 %v1117, 1.442695
  %v1124 = vpow.pop %v1123
  %v1125 = vmul.f32 %v1118, 1.442695
  %v1126 = vpow.pop %v1125
  %v1127 = vsel %vm972, %v1120, 0.0
  %1128 = vadd.xlane.f32.xlu0 %v1127
  %v1129 = vpop.xlane.xlu0 %1128
  %v1130 = vsel %vm972, %v1122, 0.0
  %1131 = vadd.xlane.f32.xlu0 %v1130
  %v1132 = vpop.xlane.xlu0 %1131
  %v1133 = vsel %vm972, %v1124, 0.0
  %1134 = vadd.xlane.f32.xlu0 %v1133
  %v1135 = vpop.xlane.xlu0 %1134
  %v1136 = vsel %vm982, %v1126, 0.0
  %1137 = vadd.xlane.f32.xlu0 %v1136
  %v1138 = vpop.xlane.xlu0 %1137
  %v1139 = vrcp.pop %v1129
  %v1140 = vrcp.pop %v1132
  %v1141 = vrcp.pop %v1135
  %v1142 = vrcp.pop %v1138
  %v1143 = vmul.f32 %v1120, %v1139
  %v1144 = vmul.f32 %v1122, %v1140
  %v1145 = vmul.f32 %v1124, %v1141
  %v1146 = vmul.f32 %v1126, %v1142
  %v1147 = vpack.c.bf16 %v1144, %v1143
  %v1148 = vpack.c.bf16 %v1146, %v1145
  %1149 = vrot.lane.b32.xlu0 %v925, 48
  %v1150 = vpop.permute.xlu0 %1149
  %1151 = vrot.lane.b32.xlu0 %v926, 48
  %v1152 = vpop.permute.xlu0 %1151
  %v1155 = vsel %vm972, %v1147, 0
  %v1158 = vsel %vm972, %v1148, 0
  %v1161 = vsel %vm1031, %v1152, 0
  %1163 = vmatpush.bf16.msra.mxu0 0
  %1164 = vmatpush.bf16.msra.mxu0 0
  %1165 = vmatpush.bf16.msra.mxu0 0
  %1166 = vmatpush.bf16.msra.mxu0 0
  %1167 = vmatpush.bf16.msra.mxu0 0
  %1168 = vmatpush.bf16.msra.mxu0 0
  %1169 = vmatpush.bf16.msra.mxu0 %v1161
  %1170 = vmatpush.bf16.msra.mxu0 %v1150
  %1171 = vmatmul.bf16.gmra.mxu0 %v1155
  %v1172 = vpop.f32.mrf.mxu0
  %v1173 = vadd.f32 0.0, %v1172
  %v1174 = vpop.f32.mrf.mxu0
  %v1175 = vadd.f32 0.0, %v1174
  %1176 = vmatmul.bf16.gmra.mxu0 %v1158
  %v1177 = vpop.f32.mrf.mxu0
  %v1178 = vadd.f32 0.0, %v1177
  %v1179 = vpop.f32.mrf.mxu0
  %v1180 = vadd.f32 0.0, %v1179
  %1181 = vdwg.mxu0
  %v1182 = vpack.c.bf16 %v1175, %v1173
  %v1183 = vpack.c.bf16 %v1180, %v1178
  %1184 = vrot.lane.b32.xlu0 %v897, 32
  %v1185 = vpop.permute.xlu0 %1184
  %v1188 = vsel %vm188, %v1182, 0
  %v1191 = vsel %vm188, %v1183, 0
  %1193 = vmatpush.bf16.msra.mxu0 0
  %1194 = vmatpush.bf16.msra.mxu0 0
  %1195 = vmatpush.bf16.msra.mxu0 0
  %1196 = vmatpush.bf16.msra.mxu0 0
  %1197 = vmatpush.bf16.msra.mxu0 0
  %1198 = vmatpush.bf16.msra.mxu0 0
  %1199 = vmatpush.bf16.msra.mxu0 0
  %1200 = vmatpush.bf16.msra.mxu0 %v1185
  %1201 = vmatmul.bf16.gmra.mxu0 %v1188
  %v1202 = vpop.f32.mrf.mxu0
  %v1203 = vadd.f32 0.0, %v1202
  %v1204 = vpop.f32.mrf.mxu0
  %v1205 = vadd.f32 0.0, %v1204
  %1206 = vmatmul.bf16.gmra.mxu0 %v1191
  %v1207 = vpop.f32.mrf.mxu0
  %v1208 = vadd.f32 0.0, %v1207
  %v1209 = vpop.f32.mrf.mxu0
  %v1210 = vadd.f32 0.0, %v1209
  %1211 = vdwg.mxu0
  %1212 = vrot.lane.b32.xlu0 %v896, 32
  %v1213 = vpop.permute.xlu0 %1212
  %v1216 = vsel %vm188, %v1054, 0
  %v1219 = vsel %vm188, %v1055, 0
  %1221 = vmatpush.bf16.msra.mxu0 0
  %1222 = vmatpush.bf16.msra.mxu0 0
  %1223 = vmatpush.bf16.msra.mxu0 0
  %1224 = vmatpush.bf16.msra.mxu0 0
  %1225 = vmatpush.bf16.msra.mxu0 0
  %1226 = vmatpush.bf16.msra.mxu0 0
  %1227 = vmatpush.bf16.msra.mxu0 0
  %1228 = vmatpush.bf16.msra.mxu0 %v1213
  %1229 = vmatmul.bf16.gmra.mxu0 %v1216
  %v1230 = vpop.f32.mrf.mxu0
  %v1231 = vadd.f32 %v1203, %v1230
  %v1232 = vpop.f32.mrf.mxu0
  %v1233 = vadd.f32 %v1205, %v1232
  %1234 = vmatmul.bf16.gmra.mxu0 %v1219
  %v1235 = vpop.f32.mrf.mxu0
  %v1236 = vadd.f32 %v1208, %v1235
  %v1237 = vpop.f32.mrf.mxu0
  %v1238 = vadd.f32 %v1210, %v1237
  %1239 = vdwg.mxu0
  %1241 = vrot.lane.b32.xlu0 %v887, 32
  %v1242 = vpop.permute.xlu0 %1241
  %v1244 = vadd.f32 %v1231, %v1242
  %v1245 = vadd.f32 %v1233, %v1242
  %v1246 = vadd.f32 %v1236, %v1242
  %v1247 = vadd.f32 %v1238, %v1242
  %v1248 = vadd.f32 %v125, %v1244
  %v1249 = vadd.f32 %v127, %v1245
  %v1250 = vadd.f32 %v130, %v1246
  %v1251 = vadd.f32 %v132, %v1247
  %v1252 = vld [vmem:[%s3 + $0x9] sm:$0x1]
  %v1253 = vld [vmem:[%s3 + $0xe] sm:$0x1]
  %v1254 = vsel %vm154, %v1248, 0.0
  %1255 = vadd.xlane.f32.xlu0 %v1254
  %v1256 = vpop.xlane.xlu0 %1255
  %v1257 = vsel %vm154, %v1249, 0.0
  %1258 = vadd.xlane.f32.xlu0 %v1257
  %v1259 = vpop.xlane.xlu0 %1258
  %v1260 = vsel %vm154, %v1250, 0.0
  %1261 = vadd.xlane.f32.xlu0 %v1260
  %v1262 = vpop.xlane.xlu0 %1261
  %vm1263 = vcmask 257024
  %v1264 = vsel %vm1263, %v1251, 0.0
  %1265 = vadd.xlane.f32.xlu0 %v1264
  %v1266 = vpop.xlane.xlu0 %1265
  %v1267 = vmul.f32 %v1256, %v529
  %v1268 = vmul.f32 %v1259, %v529
  %v1269 = vmul.f32 %v1262, %v529
  %v1270 = vmul.f32 %v1266, %v529
  %v1271 = vmul.f32 %v1248, %v1248
  %v1272 = vmul.f32 %v1249, %v1249
  %v1273 = vmul.f32 %v1250, %v1250
  %v1274 = vmul.f32 %v1251, %v1251
  %v1275 = vsel %vm154, %v1271, 0.0
  %1276 = vadd.xlane.f32.xlu0 %v1275
  %v1277 = vpop.xlane.xlu0 %1276
  %v1278 = vsel %vm154, %v1272, 0.0
  %1279 = vadd.xlane.f32.xlu0 %v1278
  %v1280 = vpop.xlane.xlu0 %1279
  %v1281 = vsel %vm154, %v1273, 0.0
  %1282 = vadd.xlane.f32.xlu0 %v1281
  %v1283 = vpop.xlane.xlu0 %1282
  %v1284 = vsel %vm1263, %v1274, 0.0
  %1285 = vadd.xlane.f32.xlu0 %v1284
  %v1286 = vpop.xlane.xlu0 %1285
  %v1287 = vmul.f32 %v1277, %v529
  %v1288 = vmul.f32 %v1280, %v529
  %v1289 = vmul.f32 %v1283, %v529
  %v1290 = vmul.f32 %v1286, %v529
  %v1291 = vmul.f32 %v1267, %v1267
  %v1292 = vmul.f32 %v1268, %v1268
  %v1293 = vmul.f32 %v1269, %v1269
  %v1294 = vmul.f32 %v1270, %v1270
  %v1295 = vsub.f32 %v1287, %v1291
  %v1296 = vsub.f32 %v1288, %v1292
  %v1297 = vsub.f32 %v1289, %v1293
  %v1298 = vsub.f32 %v1290, %v1294
  %v1299 = vmax.f32 %v1295, 0.0
  %v1300 = vmax.f32 %v1296, 0.0
  %v1301 = vmax.f32 %v1297, 0.0
  %v1302 = vmax.f32 %v1298, 0.0
  %v1303 = vsub.f32 %v1248, %v1267
  %v1304 = vsub.f32 %v1249, %v1268
  %v1305 = vsub.f32 %v1250, %v1269
  %v1306 = vsub.f32 %v1251, %v1270
  %v1307 = vadd.f32 %v1299, 1e-05
  %v1308 = vadd.f32 %v1300, 1e-05
  %v1309 = vadd.f32 %v1301, 1e-05
  %v1310 = vadd.f32 %v1302, 1e-05
  %v1311 = vrsqrt.pop %v1307
  %v1312 = vmul.f32 %v1311, %v1307
  %v1313 = vmul.f32 %v1312, %v1311
  %v1314 = vmul.f32 0.5, %v1313
  %v1315 = vsub.f32 1.5, %v1314
  %v1316 = vmul.f32 %v1311, %v1315
  %vm1317 = vweird.f32 %v1307
  %vm1318 = vweird.f32 %v1311
  %vm1319 = vmor %vm1317, %vm1318
  %v1320 = vsel %vm1319, %v1311, %v1316
  %v1321 = vrsqrt.pop %v1308
  %v1322 = vmul.f32 %v1321, %v1308
  %v1323 = vmul.f32 %v1322, %v1321
  %v1324 = vmul.f32 0.5, %v1323
  %v1325 = vsub.f32 1.5, %v1324
  %v1326 = vmul.f32 %v1321, %v1325
  %vm1327 = vweird.f32 %v1308
  %vm1328 = vweird.f32 %v1321
  %vm1329 = vmor %vm1327, %vm1328
  %v1330 = vsel %vm1329, %v1321, %v1326
  %v1331 = vrsqrt.pop %v1309
  %v1332 = vmul.f32 %v1331, %v1309
  %v1333 = vmul.f32 %v1332, %v1331
  %v1334 = vmul.f32 0.5, %v1333
  %v1335 = vsub.f32 1.5, %v1334
  %v1336 = vmul.f32 %v1331, %v1335
  %vm1337 = vweird.f32 %v1309
  %vm1338 = vweird.f32 %v1331
  %vm1339 = vmor %vm1337, %vm1338
  %v1340 = vsel %vm1339, %v1331, %v1336
  %v1341 = vrsqrt.pop %v1310
  %v1342 = vmul.f32 %v1341, %v1310
  %v1343 = vmul.f32 %v1342, %v1341
  %v1344 = vmul.f32 0.5, %v1343
  %v1345 = vsub.f32 1.5, %v1344
  %v1346 = vmul.f32 %v1341, %v1345
  %vm1347 = vweird.f32 %v1310
  %vm1348 = vweird.f32 %v1341
  %vm1349 = vmor %vm1347, %vm1348
  %v1350 = vsel %vm1349, %v1341, %v1346
  %v1351 = vmul.f32 %v1303, %v1320
  %v1352 = vmul.f32 %v1304, %v1330
  %v1353 = vmul.f32 %v1305, %v1340
  %v1354 = vmul.f32 %v1306, %v1350
  %v1355 = vperm.slane %v1252, 0
  %v1356 = vmul.f32 %v1351, %v1355
  %v1357 = vmul.f32 %v1352, %v1355
  %v1358 = vmul.f32 %v1353, %v1355
  %v1359 = vmul.f32 %v1354, %v1355
  %v1360 = vperm.slane %v1253, 0
  %v1361 = vadd.f32 %v1356, %v1360
  %v1362 = vadd.f32 %v1357, %v1360
  %v1363 = vadd.f32 %v1358, %v1360
  %v1364 = vadd.f32 %v1359, %v1360
  %v1365 = vld [vmem:[%s1 + $0xc] sm:$0xf]
  %v1366 = vld [vmem:[%s1 + $0x24] sm:$0xf]
  %v1367 = vld [vmem:[%s1 + $0x3c] sm:$0xf]
  %v1368 = vld [vmem:[%s1 + $0x54] sm:$0xf]
  %v1369 = vld [vmem:[%s3 + $0x2] sm:$0x1]
  %v1370 = vpack.c.bf16 %v1362, %v1361
  %v1371 = vpack.c.bf16 %v1364, %v1363
  %v1372 = vperm.slane %v1369, 0
  %v1377 = vunpack.c.l.b16 %v1365
  %v1378 = vunpack.c.l.b16 %v1366
  %v1379 = vunpack.c.l.b16 %v1367
  %v1380 = vunpack.c.l.b16 %v1368
  %v1381 = vpack.c.b16 %v1378, %v1377
  %v1382 = vpack.c.b16 %v1380, %v1379
  %v1386 = vsel %vm154, %v1370, 0
  %v1389 = vsel %vm154, %v1371, 0
  %1391 = vmatpush.bf16.msra.mxu0 0
  %1392 = vmatpush.bf16.msra.mxu0 0
  %1393 = vmatpush.bf16.msra.mxu0 0
  %1394 = vmatpush.bf16.msra.mxu0 0
  %1395 = vmatpush.bf16.msra.mxu0 0
  %1396 = vmatpush.bf16.msra.mxu0 0
  %1397 = vmatpush.bf16.msra.mxu0 %v1382
  %1398 = vmatpush.bf16.msra.mxu0 %v1381
  %1399 = vmatmul.bf16.gmra.mxu0 %v1386
  %v1400 = vpop.f32.mrf.mxu0
  %v1401 = vadd.f32 %v1372, %v1400
  %v1402 = vpop.f32.mrf.mxu0
  %v1403 = vadd.f32 %v1372, %v1402
  %1404 = vmatmul.bf16.gmra.mxu0 %v1389
  %v1405 = vpop.f32.mrf.mxu0
  %v1406 = vadd.f32 %v1372, %v1405
  %v1407 = vpop.f32.mrf.mxu0
  %v1408 = vadd.f32 %v1372, %v1407
  %1409 = vdwg.mxu0
  %v1410 = vpack.c.bf16 %v877, %v876
  %v1411 = vpack.c.bf16 %v879, %v878
  %1412 = vrot.lane.b32.xlu0 %v1381, 96
  %v1413 = vpop.permute.xlu0 %1412
  %1414 = vrot.lane.b32.xlu0 %v1382, 96
  %v1415 = vpop.permute.xlu0 %1414
  %1419 = vrot.lane.b32.xlu0 %v1372, 96
  %v1420 = vpop.permute.xlu0 %1419
  %v1423 = vsel %vm154, %v1410, 0
  %v1426 = vsel %vm154, %v1411, 0
  %1428 = vmatpush.bf16.msra.mxu0 0
  %1429 = vmatpush.bf16.msra.mxu0 0
  %1430 = vmatpush.bf16.msra.mxu0 0
  %1431 = vmatpush.bf16.msra.mxu0 0
  %1432 = vmatpush.bf16.msra.mxu0 0
  %1433 = vmatpush.bf16.msra.mxu0 0
  %1434 = vmatpush.bf16.msra.mxu0 %v1415
  %1435 = vmatpush.bf16.msra.mxu0 %v1413
  %1436 = vmatmul.bf16.gmra.mxu0 %v1423
  %v1437 = vpop.f32.mrf.mxu0
  %v1438 = vadd.f32 %v1420, %v1437
  %v1439 = vpop.f32.mrf.mxu0
  %v1440 = vadd.f32 %v1420, %v1439
  %1441 = vmatmul.bf16.gmra.mxu0 %v1426
  %v1442 = vpop.f32.mrf.mxu0
  %v1443 = vadd.f32 %v1420, %v1442
  %v1444 = vpop.f32.mrf.mxu0
  %v1445 = vadd.f32 %v1420, %v1444
  %1446 = vdwg.mxu0
  %v1447 = vpack.c.bf16 %v1403, %v1401
  %v1448 = vpack.c.bf16 %v1408, %v1406
  %v1449 = vpack.c.bf16 %v1440, %v1438
  %v1450 = vpack.c.bf16 %v1445, %v1443
  %v1452 = vsel %vm188, %v1447, 0
  %v1455 = vsel %vm188, %v1448, 0
  %v1458 = vsel %vm188, %v1449, 0
  %v1461 = vsel %vm188, %v1450, 0
  %1463 = vmatpush.bf16.xpose.msra.mxu0 0
  %1464 = vmatpush.bf16.xpose.msra.mxu0 0
  %1465 = vmatpush.bf16.xpose.msra.mxu0 0
  %1466 = vmatpush.bf16.xpose.msra.mxu0 0
  %1467 = vmatpush.bf16.xpose.msra.mxu0 0
  %1468 = vmatpush.bf16.xpose.msra.mxu0 0
  %1469 = vmatpush.bf16.xpose.msra.mxu0 %v1461
  %1470 = vmatpush.bf16.xpose.msra.mxu0 %v1458
  %1471 = vmatmul.bf16.gmra.mxu0 %v1452
  %v1472 = vpop.f32.mrf.mxu0
  %v1473 = vadd.f32 0.0, %v1472
  %v1474 = vpop.f32.mrf.mxu0
  %v1475 = vadd.f32 0.0, %v1474
  %1476 = vmatmul.bf16.gmra.mxu0 %v1455
  %v1477 = vpop.f32.mrf.mxu0
  %v1478 = vadd.f32 0.0, %v1477
  %v1479 = vpop.f32.mrf.mxu0
  %v1480 = vadd.f32 0.0, %v1479
  %1481 = vdwg.mxu0
  %v1482 = vmul.f32 %v1473, 0.25
  %v1483 = vmul.f32 %v1475, 0.25
  %v1484 = vmul.f32 %v1478, 0.25
  %v1485 = vmul.f32 %v1480, 0.25
  %v1486 = vadd.f32 %v1482, %v26
  %v1487 = vadd.f32 %v1483, %v27
  %v1488 = vadd.f32 %v1484, %v28
  %v1489 = vadd.f32 %v1485, %v29
  %v1490 = vsel %vm228, %v1486, -inf
  %1491 = vmax.xlane.f32.xlu0 %v1490
  %v1492 = vpop.xlane.xlu0 %1491
  %v1493 = vsel %vm228, %v1487, -inf
  %1494 = vmax.xlane.f32.xlu0 %v1493
  %v1495 = vpop.xlane.xlu0 %1494
  %v1496 = vsel %vm228, %v1488, -inf
  %1497 = vmax.xlane.f32.xlu0 %v1496
  %v1498 = vpop.xlane.xlu0 %1497
  %vm1499 = vcmask 240640
  %v1500 = vsel %vm1499, %v1489, -inf
  %1501 = vmax.xlane.f32.xlu0 %v1500
  %v1502 = vpop.xlane.xlu0 %1501
  %v1503 = vsub.f32 %v1486, %v1492
  %v1504 = vsub.f32 %v1487, %v1495
  %v1505 = vsub.f32 %v1488, %v1498
  %v1506 = vsub.f32 %v1489, %v1502
  %v1507 = vmul.f32 %v1503, 1.442695
  %v1508 = vpow.pop %v1507
  %v1509 = vmul.f32 %v1504, 1.442695
  %v1510 = vpow.pop %v1509
  %v1511 = vmul.f32 %v1505, 1.442695
  %v1512 = vpow.pop %v1511
  %v1513 = vmul.f32 %v1506, 1.442695
  %v1514 = vpow.pop %v1513
  %v1515 = vsel %vm228, %v1508, 0.0
  %1516 = vadd.xlane.f32.xlu0 %v1515
  %v1517 = vpop.xlane.xlu0 %1516
  %v1518 = vsel %vm228, %v1510, 0.0
  %1519 = vadd.xlane.f32.xlu0 %v1518
  %v1520 = vpop.xlane.xlu0 %1519
  %v1521 = vsel %vm228, %v1512, 0.0
  %1522 = vadd.xlane.f32.xlu0 %v1521
  %v1523 = vpop.xlane.xlu0 %1522
  %v1524 = vsel %vm1499, %v1514, 0.0
  %1525 = vadd.xlane.f32.xlu0 %v1524
  %v1526 = vpop.xlane.xlu0 %1525
  %v1527 = vrcp.pop %v1517
  %v1528 = vrcp.pop %v1520
  %v1529 = vrcp.pop %v1523
  %v1530 = vrcp.pop %v1526
  %v1531 = vmul.f32 %v1508, %v1527
  %v1532 = vmul.f32 %v1510, %v1528
  %v1533 = vmul.f32 %v1512, %v1529
  %v1534 = vmul.f32 %v1514, %v1530
  %v1535 = vpack.c.bf16 %v1532, %v1531
  %v1536 = vpack.c.bf16 %v1534, %v1533
  %1539 = vrot.lane.b32.xlu0 %v1449, 96
  %v1540 = vpop.permute.xlu0 %1539
  %1541 = vrot.lane.b32.xlu0 %v1450, 96
  %v1542 = vpop.permute.xlu0 %1541
  %v1545 = vsel %vm228, %v1535, 0
  %v1548 = vsel %vm228, %v1536, 0
  %v1551 = vsel %vm287, %v1542, 0
  %1553 = vmatpush.bf16.msra.mxu0 0
  %1554 = vmatpush.bf16.msra.mxu0 0
  %1555 = vmatpush.bf16.msra.mxu0 0
  %1556 = vmatpush.bf16.msra.mxu0 0
  %1557 = vmatpush.bf16.msra.mxu0 0
  %1558 = vmatpush.bf16.msra.mxu0 0
  %1559 = vmatpush.bf16.msra.mxu0 %v1551
  %1560 = vmatpush.bf16.msra.mxu0 %v1540
  %1561 = vmatmul.bf16.gmra.mxu0 %v1545
  %v1562 = vpop.f32.mrf.mxu0
  %v1563 = vadd.f32 0.0, %v1562
  %v1564 = vpop.f32.mrf.mxu0
  %v1565 = vadd.f32 0.0, %v1564
  %1566 = vmatmul.bf16.gmra.mxu0 %v1548
  %v1567 = vpop.f32.mrf.mxu0
  %v1568 = vadd.f32 0.0, %v1567
  %v1569 = vpop.f32.mrf.mxu0
  %v1570 = vadd.f32 0.0, %v1569
  %1571 = vdwg.mxu0
  %v1572 = vpack.c.bf16 %v1565, %v1563
  %v1573 = vpack.c.bf16 %v1570, %v1568
  %1576 = vrot.lane.b32.xlu0 %v1447, 112
  %v1577 = vpop.permute.xlu0 %1576
  %1578 = vrot.lane.b32.xlu0 %v1448, 112
  %v1579 = vpop.permute.xlu0 %1578
  %1580 = vrot.lane.b32.xlu0 %v1449, 112
  %v1581 = vpop.permute.xlu0 %1580
  %1582 = vrot.lane.b32.xlu0 %v1450, 112
  %v1583 = vpop.permute.xlu0 %1582
  %v1585 = vsel %vm188, %v1577, 0
  %v1588 = vsel %vm188, %v1579, 0
  %v1591 = vsel %vm188, %v1581, 0
  %v1594 = vsel %vm188, %v1583, 0
  %1596 = vmatpush.bf16.xpose.msra.mxu0 0
  %1597 = vmatpush.bf16.xpose.msra.mxu0 0
  %1598 = vmatpush.bf16.xpose.msra.mxu0 0
  %1599 = vmatpush.bf16.xpose.msra.mxu0 0
  %1600 = vmatpush.bf16.xpose.msra.mxu0 0
  %1601 = vmatpush.bf16.xpose.msra.mxu0 0
  %1602 = vmatpush.bf16.xpose.msra.mxu0 %v1594
  %1603 = vmatpush.bf16.xpose.msra.mxu0 %v1591
  %1604 = vmatmul.bf16.gmra.mxu0 %v1585
  %v1605 = vpop.f32.mrf.mxu0
  %v1606 = vadd.f32 0.0, %v1605
  %v1607 = vpop.f32.mrf.mxu0
  %v1608 = vadd.f32 0.0, %v1607
  %1609 = vmatmul.bf16.gmra.mxu0 %v1588
  %v1610 = vpop.f32.mrf.mxu0
  %v1611 = vadd.f32 0.0, %v1610
  %v1612 = vpop.f32.mrf.mxu0
  %v1613 = vadd.f32 0.0, %v1612
  %1614 = vdwg.mxu0
  %v1615 = vmul.f32 %v1606, 0.25
  %v1616 = vmul.f32 %v1608, 0.25
  %v1617 = vmul.f32 %v1611, 0.25
  %v1618 = vmul.f32 %v1613, 0.25
  %v1619 = vadd.f32 %v1615, %v26
  %v1620 = vadd.f32 %v1616, %v27
  %v1621 = vadd.f32 %v1617, %v28
  %v1622 = vadd.f32 %v1618, %v29
  %v1623 = vsel %vm228, %v1619, -inf
  %1624 = vmax.xlane.f32.xlu0 %v1623
  %v1625 = vpop.xlane.xlu0 %1624
  %v1626 = vsel %vm228, %v1620, -inf
  %1627 = vmax.xlane.f32.xlu0 %v1626
  %v1628 = vpop.xlane.xlu0 %1627
  %v1629 = vsel %vm228, %v1621, -inf
  %1630 = vmax.xlane.f32.xlu0 %v1629
  %v1631 = vpop.xlane.xlu0 %1630
  %v1632 = vsel %vm1499, %v1622, -inf
  %1633 = vmax.xlane.f32.xlu0 %v1632
  %v1634 = vpop.xlane.xlu0 %1633
  %v1635 = vsub.f32 %v1619, %v1625
  %v1636 = vsub.f32 %v1620, %v1628
  %v1637 = vsub.f32 %v1621, %v1631
  %v1638 = vsub.f32 %v1622, %v1634
  %v1639 = vmul.f32 %v1635, 1.442695
  %v1640 = vpow.pop %v1639
  %v1641 = vmul.f32 %v1636, 1.442695
  %v1642 = vpow.pop %v1641
  %v1643 = vmul.f32 %v1637, 1.442695
  %v1644 = vpow.pop %v1643
  %v1645 = vmul.f32 %v1638, 1.442695
  %v1646 = vpow.pop %v1645
  %v1647 = vsel %vm228, %v1640, 0.0
  %1648 = vadd.xlane.f32.xlu0 %v1647
  %v1649 = vpop.xlane.xlu0 %1648
  %v1650 = vsel %vm228, %v1642, 0.0
  %1651 = vadd.xlane.f32.xlu0 %v1650
  %v1652 = vpop.xlane.xlu0 %1651
  %v1653 = vsel %vm228, %v1644, 0.0
  %1654 = vadd.xlane.f32.xlu0 %v1653
  %v1655 = vpop.xlane.xlu0 %1654
  %v1656 = vsel %vm1499, %v1646, 0.0
  %1657 = vadd.xlane.f32.xlu0 %v1656
  %v1658 = vpop.xlane.xlu0 %1657
  %v1659 = vrcp.pop %v1649
  %v1660 = vrcp.pop %v1652
  %v1661 = vrcp.pop %v1655
  %v1662 = vrcp.pop %v1658
  %v1663 = vmul.f32 %v1640, %v1659
  %v1664 = vmul.f32 %v1642, %v1660
  %v1665 = vmul.f32 %v1644, %v1661
  %v1666 = vmul.f32 %v1646, %v1662
  %v1667 = vpack.c.bf16 %v1664, %v1663
  %v1668 = vpack.c.bf16 %v1666, %v1665
  %1669 = vrot.lane.b32.xlu0 %v1449, 80
  %v1670 = vpop.permute.xlu0 %1669
  %1671 = vrot.lane.b32.xlu0 %v1450, 80
  %v1672 = vpop.permute.xlu0 %1671
  %v1675 = vsel %vm228, %v1667, 0
  %v1678 = vsel %vm228, %v1668, 0
  %v1681 = vsel %vm287, %v1672, 0
  %1683 = vmatpush.bf16.msra.mxu0 0
  %1684 = vmatpush.bf16.msra.mxu0 0
  %1685 = vmatpush.bf16.msra.mxu0 0
  %1686 = vmatpush.bf16.msra.mxu0 0
  %1687 = vmatpush.bf16.msra.mxu0 0
  %1688 = vmatpush.bf16.msra.mxu0 0
  %1689 = vmatpush.bf16.msra.mxu0 %v1681
  %1690 = vmatpush.bf16.msra.mxu0 %v1670
  %1691 = vmatmul.bf16.gmra.mxu0 %v1675
  %v1692 = vpop.f32.mrf.mxu0
  %v1693 = vadd.f32 0.0, %v1692
  %v1694 = vpop.f32.mrf.mxu0
  %v1695 = vadd.f32 0.0, %v1694
  %1696 = vmatmul.bf16.gmra.mxu0 %v1678
  %v1697 = vpop.f32.mrf.mxu0
  %v1698 = vadd.f32 0.0, %v1697
  %v1699 = vpop.f32.mrf.mxu0
  %v1700 = vadd.f32 0.0, %v1699
  %1701 = vdwg.mxu0
  %v1702 = vpack.c.bf16 %v1695, %v1693
  %v1703 = vpack.c.bf16 %v1700, %v1698
  %1704 = vrot.lane.b32.xlu0 %v1382, 32
  %v1705 = vpop.permute.xlu0 %1704
  %v1708 = vsel %vm188, %v1702, 0
  %v1711 = vsel %vm188, %v1703, 0
  %1713 = vmatpush.bf16.msra.mxu0 0
  %1714 = vmatpush.bf16.msra.mxu0 0
  %1715 = vmatpush.bf16.msra.mxu0 0
  %1716 = vmatpush.bf16.msra.mxu0 0
  %1717 = vmatpush.bf16.msra.mxu0 0
  %1718 = vmatpush.bf16.msra.mxu0 0
  %1719 = vmatpush.bf16.msra.mxu0 0
  %1720 = vmatpush.bf16.msra.mxu0 %v1705
  %1721 = vmatmul.bf16.gmra.mxu0 %v1708
  %v1722 = vpop.f32.mrf.mxu0
  %v1723 = vadd.f32 0.0, %v1722
  %v1724 = vpop.f32.mrf.mxu0
  %v1725 = vadd.f32 0.0, %v1724
  %1726 = vmatmul.bf16.gmra.mxu0 %v1711
  %v1727 = vpop.f32.mrf.mxu0
  %v1728 = vadd.f32 0.0, %v1727
  %v1729 = vpop.f32.mrf.mxu0
  %v1730 = vadd.f32 0.0, %v1729
  %1731 = vdwg.mxu0
  %1732 = vrot.lane.b32.xlu0 %v1381, 32
  %v1733 = vpop.permute.xlu0 %1732
  %v1736 = vsel %vm188, %v1572, 0
  %v1739 = vsel %vm188, %v1573, 0
  %1741 = vmatpush.bf16.msra.mxu0 0
  %1742 = vmatpush.bf16.msra.mxu0 0
  %1743 = vmatpush.bf16.msra.mxu0 0
  %1744 = vmatpush.bf16.msra.mxu0 0
  %1745 = vmatpush.bf16.msra.mxu0 0
  %1746 = vmatpush.bf16.msra.mxu0 0
  %1747 = vmatpush.bf16.msra.mxu0 0
  %1748 = vmatpush.bf16.msra.mxu0 %v1733
  %1749 = vmatmul.bf16.gmra.mxu0 %v1736
  %v1750 = vpop.f32.mrf.mxu0
  %v1751 = vadd.f32 %v1723, %v1750
  %v1752 = vpop.f32.mrf.mxu0
  %v1753 = vadd.f32 %v1725, %v1752
  %1754 = vmatmul.bf16.gmra.mxu0 %v1739
  %v1755 = vpop.f32.mrf.mxu0
  %v1756 = vadd.f32 %v1728, %v1755
  %v1757 = vpop.f32.mrf.mxu0
  %v1758 = vadd.f32 %v1730, %v1757
  %1759 = vdwg.mxu0
  %1760 = vrot.lane.b32.xlu0 %v1372, 32
  %v1761 = vpop.permute.xlu0 %1760
  %v1763 = vadd.f32 %v1751, %v1761
  %v1764 = vadd.f32 %v1753, %v1761
  %v1765 = vadd.f32 %v1756, %v1761
  %v1766 = vadd.f32 %v1758, %v1761
  %v1767 = vadd.f32 %v1361, %v1763
  %v1768 = vadd.f32 %v1362, %v1764
  %v1769 = vadd.f32 %v1363, %v1765
  %v1770 = vadd.f32 %v1364, %v1766
  %v1771 = vld [vmem:[%s3 + $0xa] sm:$0x1]
  %v1772 = vld [vmem:[%s3 + $0xf] sm:$0x1]
  %v1773 = vsel %vm154, %v1767, 0.0
  %1774 = vadd.xlane.f32.xlu0 %v1773
  %v1775 = vpop.xlane.xlu0 %1774
  %v1776 = vsel %vm154, %v1768, 0.0
  %1777 = vadd.xlane.f32.xlu0 %v1776
  %v1778 = vpop.xlane.xlu0 %1777
  %v1779 = vsel %vm154, %v1769, 0.0
  %1780 = vadd.xlane.f32.xlu0 %v1779
  %v1781 = vpop.xlane.xlu0 %1780
  %v1782 = vsel %vm1263, %v1770, 0.0
  %1783 = vadd.xlane.f32.xlu0 %v1782
  %v1784 = vpop.xlane.xlu0 %1783
  %v1785 = vmul.f32 %v1775, %v529
  %v1786 = vmul.f32 %v1778, %v529
  %v1787 = vmul.f32 %v1781, %v529
  %v1788 = vmul.f32 %v1784, %v529
  %v1789 = vmul.f32 %v1767, %v1767
  %v1790 = vmul.f32 %v1768, %v1768
  %v1791 = vmul.f32 %v1769, %v1769
  %v1792 = vmul.f32 %v1770, %v1770
  %v1793 = vsel %vm154, %v1789, 0.0
  %1794 = vadd.xlane.f32.xlu0 %v1793
  %v1795 = vpop.xlane.xlu0 %1794
  %v1796 = vsel %vm154, %v1790, 0.0
  %1797 = vadd.xlane.f32.xlu0 %v1796
  %v1798 = vpop.xlane.xlu0 %1797
  %v1799 = vsel %vm154, %v1791, 0.0
  %1800 = vadd.xlane.f32.xlu0 %v1799
  %v1801 = vpop.xlane.xlu0 %1800
  %v1802 = vsel %vm1263, %v1792, 0.0
  %1803 = vadd.xlane.f32.xlu0 %v1802
  %v1804 = vpop.xlane.xlu0 %1803
  %v1805 = vmul.f32 %v1795, %v529
  %v1806 = vmul.f32 %v1798, %v529
  %v1807 = vmul.f32 %v1801, %v529
  %v1808 = vmul.f32 %v1804, %v529
  %v1809 = vmul.f32 %v1785, %v1785
  %v1810 = vmul.f32 %v1786, %v1786
  %v1811 = vmul.f32 %v1787, %v1787
  %v1812 = vmul.f32 %v1788, %v1788
  %v1813 = vsub.f32 %v1805, %v1809
  %v1814 = vsub.f32 %v1806, %v1810
  %v1815 = vsub.f32 %v1807, %v1811
  %v1816 = vsub.f32 %v1808, %v1812
  %v1817 = vmax.f32 %v1813, 0.0
  %v1818 = vmax.f32 %v1814, 0.0
  %v1819 = vmax.f32 %v1815, 0.0
  %v1820 = vmax.f32 %v1816, 0.0
  %v1821 = vsub.f32 %v1767, %v1785
  %v1822 = vsub.f32 %v1768, %v1786
  %v1823 = vsub.f32 %v1769, %v1787
  %v1824 = vsub.f32 %v1770, %v1788
  %v1825 = vadd.f32 %v1817, 1e-05
  %v1826 = vadd.f32 %v1818, 1e-05
  %v1827 = vadd.f32 %v1819, 1e-05
  %v1828 = vadd.f32 %v1820, 1e-05
  %v1829 = vrsqrt.pop %v1825
  %v1830 = vmul.f32 %v1829, %v1825
  %v1831 = vmul.f32 %v1830, %v1829
  %v1832 = vmul.f32 0.5, %v1831
  %v1833 = vsub.f32 1.5, %v1832
  %v1834 = vmul.f32 %v1829, %v1833
  %vm1835 = vweird.f32 %v1825
  %vm1836 = vweird.f32 %v1829
  %vm1837 = vmor %vm1835, %vm1836
  %v1838 = vsel %vm1837, %v1829, %v1834
  %v1839 = vrsqrt.pop %v1826
  %v1840 = vmul.f32 %v1839, %v1826
  %v1841 = vmul.f32 %v1840, %v1839
  %v1842 = vmul.f32 0.5, %v1841
  %v1843 = vsub.f32 1.5, %v1842
  %v1844 = vmul.f32 %v1839, %v1843
  %vm1845 = vweird.f32 %v1826
  %vm1846 = vweird.f32 %v1839
  %vm1847 = vmor %vm1845, %vm1846
  %v1848 = vsel %vm1847, %v1839, %v1844
  %v1849 = vrsqrt.pop %v1827
  %v1850 = vmul.f32 %v1849, %v1827
  %v1851 = vmul.f32 %v1850, %v1849
  %v1852 = vmul.f32 0.5, %v1851
  %v1853 = vsub.f32 1.5, %v1852
  %v1854 = vmul.f32 %v1849, %v1853
  %vm1855 = vweird.f32 %v1827
  %vm1856 = vweird.f32 %v1849
  %vm1857 = vmor %vm1855, %vm1856
  %v1858 = vsel %vm1857, %v1849, %v1854
  %v1859 = vrsqrt.pop %v1828
  %v1860 = vmul.f32 %v1859, %v1828
  %v1861 = vmul.f32 %v1860, %v1859
  %v1862 = vmul.f32 0.5, %v1861
  %v1863 = vsub.f32 1.5, %v1862
  %v1864 = vmul.f32 %v1859, %v1863
  %vm1865 = vweird.f32 %v1828
  %vm1866 = vweird.f32 %v1859
  %vm1867 = vmor %vm1865, %vm1866
  %v1868 = vsel %vm1867, %v1859, %v1864
  %v1869 = vmul.f32 %v1821, %v1838
  %v1870 = vmul.f32 %v1822, %v1848
  %v1871 = vmul.f32 %v1823, %v1858
  %v1872 = vmul.f32 %v1824, %v1868
  %v1873 = vperm.slane %v1771, 0
  %v1874 = vmul.f32 %v1869, %v1873
  %v1875 = vmul.f32 %v1870, %v1873
  %v1876 = vmul.f32 %v1871, %v1873
  %v1877 = vmul.f32 %v1872, %v1873
  %v1878 = vperm.slane %v1772, 0
  %v1879 = vadd.f32 %v1874, %v1878
  %v1880 = vadd.f32 %v1875, %v1878
  %v1881 = vadd.f32 %v1876, %v1878
  %v1882 = vadd.f32 %v1877, %v1878
  %v1883 = vpack.c.bf16 %v1880, %v1879
  %v1884 = vpack.c.bf16 %v1882, %v1881
  %v1885 = vld [vmem:[%s1 + $0x14] sm:$0xf]
  %v1886 = vld [vmem:[%s1 + $0x2c] sm:$0xf]
  %v1887 = vld [vmem:[%s1 + $0x44] sm:$0xf]
  %v1888 = vld [vmem:[%s1 + $0x5c] sm:$0xf]
  %v1889 = vld [vmem:[%s3 + $0x4] sm:$0x1]
  %v1890 = vperm.slane %v1889, 0
  %v1895 = vunpack.c.l.b16 %v1885
  %v1896 = vunpack.c.l.b16 %v1886
  %v1897 = vunpack.c.l.b16 %v1887
  %v1898 = vunpack.c.l.b16 %v1888
  %v1899 = vpack.c.b16 %v1896, %v1895
  %v1900 = vpack.c.b16 %v1898, %v1897
  %v1904 = vsel %vm154, %v1883, 0
  %v1907 = vsel %vm154, %v1884, 0
  %1909 = vmatpush.bf16.msra.mxu0 0
  %1910 = vmatpush.bf16.msra.mxu0 0
  %1911 = vmatpush.bf16.msra.mxu0 0
  %1912 = vmatpush.bf16.msra.mxu0 0
  %1913 = vmatpush.bf16.msra.mxu0 0
  %1914 = vmatpush.bf16.msra.mxu0 0
  %1915 = vmatpush.bf16.msra.mxu0 %v1900
  %1916 = vmatpush.bf16.msra.mxu0 %v1899
  %1917 = vmatmul.bf16.gmra.mxu0 %v1904
  %v1918 = vpop.f32.mrf.mxu0
  %v1919 = vadd.f32 %v1890, %v1918
  %v1920 = vpop.f32.mrf.mxu0
  %v1921 = vadd.f32 %v1890, %v1920
  %1922 = vmatmul.bf16.gmra.mxu0 %v1907
  %v1923 = vpop.f32.mrf.mxu0
  %v1924 = vadd.f32 %v1890, %v1923
  %v1925 = vpop.f32.mrf.mxu0
  %v1926 = vadd.f32 %v1890, %v1925
  %1927 = vdwg.mxu0
  %v1928 = vmax.f32 %v1919, 0.0
  %v1929 = vmax.f32 %v1921, 0.0
  %v1930 = vmax.f32 %v1924, 0.0
  %v1931 = vmax.f32 %v1926, 0.0
  %v1932 = vpack.c.bf16 %v1929, %v1928
  %v1933 = vpack.c.bf16 %v1931, %v1930
  %s1934 = scalar_lea.vmem %s2, 64
  %v1935 = vld [vmem:[%s1934] sm:$0xf]
  %v1936 = vld [vmem:[%s1934 + $0x4] sm:$0xf]
  %v1937 = vld [vmem:[%s1934 + $0x8] sm:$0xf]
  %v1938 = vld [vmem:[%s1934 + $0xc] sm:$0xf]
  %v1939 = vld [vmem:[%s1934 + $0x10] sm:$0xf]
  %v1940 = vld [vmem:[%s1934 + $0x14] sm:$0xf]
  %v1941 = vld [vmem:[%s1934 + $0x18] sm:$0xf]
  %v1942 = vld [vmem:[%s1934 + $0x1c] sm:$0xf]
  %v1943 = vld [vmem:[%s1934 + $0x20] sm:$0xf]
  %v1944 = vld [vmem:[%s1934 + $0x24] sm:$0xf]
  %v1945 = vld [vmem:[%s1934 + $0x28] sm:$0xf]
  %v1946 = vld [vmem:[%s1934 + $0x2c] sm:$0xf]
  %v1947 = vld [vmem:[%s1934 + $0x30] sm:$0xf]
  %v1948 = vld [vmem:[%s1934 + $0x34] sm:$0xf]
  %v1949 = vld [vmem:[%s1934 + $0x38] sm:$0xf]
  %v1950 = vld [vmem:[%s1934 + $0x3c] sm:$0xf]
  %v1951 = vld [vmem:[%s3 + $0x6] sm:$0x1]
  %v1952 = vperm.slane %v1951, 0
  %v1969 = vunpack.c.l.b16 %v1935
  %v1970 = vunpack.c.l.b16 %v1936
  %v1971 = vunpack.c.l.b16 %v1937
  %v1972 = vunpack.c.l.b16 %v1938
  %v1973 = vunpack.c.l.b16 %v1939
  %v1974 = vunpack.c.l.b16 %v1940
  %v1975 = vunpack.c.l.b16 %v1941
  %v1976 = vunpack.c.l.b16 %v1942
  %v1977 = vunpack.c.l.b16 %v1943
  %v1978 = vunpack.c.l.b16 %v1944
  %v1979 = vunpack.c.l.b16 %v1945
  %v1980 = vunpack.c.l.b16 %v1946
  %v1981 = vunpack.c.l.b16 %v1947
  %v1982 = vunpack.c.l.b16 %v1948
  %v1983 = vunpack.c.l.b16 %v1949
  %v1984 = vunpack.c.l.b16 %v1950
  %v1985 = vpack.c.b16 %v1970, %v1969
  %v1986 = vpack.c.b16 %v1972, %v1971
  %v1987 = vpack.c.b16 %v1974, %v1973
  %v1988 = vpack.c.b16 %v1976, %v1975
  %v1989 = vpack.c.b16 %v1978, %v1977
  %v1990 = vpack.c.b16 %v1980, %v1979
  %v1991 = vpack.c.b16 %v1982, %v1981
  %v1992 = vpack.c.b16 %v1984, %v1983
  %2001 = vmatpush.bf16.msra.mxu0 %v1992
  %2002 = vmatpush.bf16.msra.mxu0 %v1991
  %2003 = vmatpush.bf16.msra.mxu0 %v1990
  %2004 = vmatpush.bf16.msra.mxu0 %v1989
  %2005 = vmatpush.bf16.msra.mxu0 %v1988
  %2006 = vmatpush.bf16.msra.mxu0 %v1987
  %2007 = vmatpush.bf16.msra.mxu0 %v1986
  %2008 = vmatpush.bf16.msra.mxu0 %v1985
  %2009 = vmatmul.bf16.gmra.mxu0 %v1932
  %v2010 = vpop.f32.mrf.mxu0
  %v2011 = vadd.f32 %v1952, %v2010
  %v2012 = vpop.f32.mrf.mxu0
  %v2013 = vadd.f32 %v1952, %v2012
  %2014 = vmatmul.bf16.gmra.mxu0 %v1933
  %v2015 = vpop.f32.mrf.mxu0
  %v2016 = vadd.f32 %v1952, %v2015
  %v2017 = vpop.f32.mrf.mxu0
  %v2018 = vadd.f32 %v1952, %v2017
  %2019 = vdwg.mxu0
  %v2020 = vadd.f32 %v1879, %v2011
  %v2021 = vadd.f32 %v1880, %v2013
  %v2022 = vadd.f32 %v1881, %v2016
  %v2023 = vadd.f32 %v1882, %v2018
  %v2024 = vld [vmem:[%s3 + $0xb] sm:$0x1]
  %v2025 = vld [vmem:[%s3 + $0x10] sm:$0x1]
  %v2026 = vsel %vm154, %v2020, 0.0
  %2027 = vadd.xlane.f32.xlu0 %v2026
  %v2028 = vpop.xlane.xlu0 %2027
  %v2029 = vsel %vm154, %v2021, 0.0
  %2030 = vadd.xlane.f32.xlu0 %v2029
  %v2031 = vpop.xlane.xlu0 %2030
  %v2032 = vsel %vm154, %v2022, 0.0
  %2033 = vadd.xlane.f32.xlu0 %v2032
  %v2034 = vpop.xlane.xlu0 %2033
  %v2035 = vsel %vm1263, %v2023, 0.0
  %2036 = vadd.xlane.f32.xlu0 %v2035
  %v2037 = vpop.xlane.xlu0 %2036
  %v2038 = vmul.f32 %v2028, %v529
  %v2039 = vmul.f32 %v2031, %v529
  %v2040 = vmul.f32 %v2034, %v529
  %v2041 = vmul.f32 %v2037, %v529
  %v2042 = vmul.f32 %v2020, %v2020
  %v2043 = vmul.f32 %v2021, %v2021
  %v2044 = vmul.f32 %v2022, %v2022
  %v2045 = vmul.f32 %v2023, %v2023
  %v2046 = vsel %vm154, %v2042, 0.0
  %2047 = vadd.xlane.f32.xlu0 %v2046
  %v2048 = vpop.xlane.xlu0 %2047
  %v2049 = vsel %vm154, %v2043, 0.0
  %2050 = vadd.xlane.f32.xlu0 %v2049
  %v2051 = vpop.xlane.xlu0 %2050
  %v2052 = vsel %vm154, %v2044, 0.0
  %2053 = vadd.xlane.f32.xlu0 %v2052
  %v2054 = vpop.xlane.xlu0 %2053
  %v2055 = vsel %vm1263, %v2045, 0.0
  %2056 = vadd.xlane.f32.xlu0 %v2055
  %v2057 = vpop.xlane.xlu0 %2056
  %v2058 = vmul.f32 %v2048, %v529
  %v2059 = vmul.f32 %v2051, %v529
  %v2060 = vmul.f32 %v2054, %v529
  %v2061 = vmul.f32 %v2057, %v529
  %v2062 = vmul.f32 %v2038, %v2038
  %v2063 = vmul.f32 %v2039, %v2039
  %v2064 = vmul.f32 %v2040, %v2040
  %v2065 = vmul.f32 %v2041, %v2041
  %v2066 = vsub.f32 %v2058, %v2062
  %v2067 = vsub.f32 %v2059, %v2063
  %v2068 = vsub.f32 %v2060, %v2064
  %v2069 = vsub.f32 %v2061, %v2065
  %v2070 = vmax.f32 %v2066, 0.0
  %v2071 = vmax.f32 %v2067, 0.0
  %v2072 = vmax.f32 %v2068, 0.0
  %v2073 = vmax.f32 %v2069, 0.0
  %v2074 = vsub.f32 %v2020, %v2038
  %v2075 = vsub.f32 %v2021, %v2039
  %v2076 = vsub.f32 %v2022, %v2040
  %v2077 = vsub.f32 %v2023, %v2041
  %v2078 = vadd.f32 %v2070, 1e-05
  %v2079 = vadd.f32 %v2071, 1e-05
  %v2080 = vadd.f32 %v2072, 1e-05
  %v2081 = vadd.f32 %v2073, 1e-05
  %v2082 = vrsqrt.pop %v2078
  %v2083 = vmul.f32 %v2082, %v2078
  %v2084 = vmul.f32 %v2083, %v2082
  %v2085 = vmul.f32 0.5, %v2084
  %v2086 = vsub.f32 1.5, %v2085
  %v2087 = vmul.f32 %v2082, %v2086
  %vm2088 = vweird.f32 %v2078
  %vm2089 = vweird.f32 %v2082
  %vm2090 = vmor %vm2088, %vm2089
  %v2091 = vsel %vm2090, %v2082, %v2087
  %v2092 = vrsqrt.pop %v2079
  %v2093 = vmul.f32 %v2092, %v2079
  %v2094 = vmul.f32 %v2093, %v2092
  %v2095 = vmul.f32 0.5, %v2094
  %v2096 = vsub.f32 1.5, %v2095
  %v2097 = vmul.f32 %v2092, %v2096
  %vm2098 = vweird.f32 %v2079
  %vm2099 = vweird.f32 %v2092
  %vm2100 = vmor %vm2098, %vm2099
  %v2101 = vsel %vm2100, %v2092, %v2097
  %v2102 = vrsqrt.pop %v2080
  %v2103 = vmul.f32 %v2102, %v2080
  %v2104 = vmul.f32 %v2103, %v2102
  %v2105 = vmul.f32 0.5, %v2104
  %v2106 = vsub.f32 1.5, %v2105
  %v2107 = vmul.f32 %v2102, %v2106
  %vm2108 = vweird.f32 %v2080
  %vm2109 = vweird.f32 %v2102
  %vm2110 = vmor %vm2108, %vm2109
  %v2111 = vsel %vm2110, %v2102, %v2107
  %v2112 = vrsqrt.pop %v2081
  %v2113 = vmul.f32 %v2112, %v2081
  %v2114 = vmul.f32 %v2113, %v2112
  %v2115 = vmul.f32 0.5, %v2114
  %v2116 = vsub.f32 1.5, %v2115
  %v2117 = vmul.f32 %v2112, %v2116
  %vm2118 = vweird.f32 %v2081
  %vm2119 = vweird.f32 %v2112
  %vm2120 = vmor %vm2118, %vm2119
  %v2121 = vsel %vm2120, %v2112, %v2117
  %v2122 = vmul.f32 %v2074, %v2091
  %v2123 = vmul.f32 %v2075, %v2101
  %v2124 = vmul.f32 %v2076, %v2111
  %v2125 = vmul.f32 %v2077, %v2121
  %v2126 = vperm.slane %v2024, 0
  %v2127 = vmul.f32 %v2122, %v2126
  %v2128 = vmul.f32 %v2123, %v2126
  %v2129 = vmul.f32 %v2124, %v2126
  %v2130 = vmul.f32 %v2125, %v2126
  %v2131 = vperm.slane %v2025, 0
  %v2132 = vadd.f32 %v2127, %v2131
  %v2133 = vadd.f32 %v2128, %v2131
  %v2134 = vadd.f32 %v2129, %v2131
  %v2135 = vadd.f32 %v2130, %v2131
  %v2136 = vld [vmem:[%s3 + $0x11] sm:$0x1]
  %v2137 = vld [vmem:[%s3 + $0x18] sm:$0xff]
  %v2138 = vld [vmem:[%s3 + $0x20] sm:$0xff]
  %v2139 = vld [vmem:[%s3 + $0x28] sm:$0xff]
  %v2140 = vld [vmem:[%s3 + $0x30] sm:$0xf]
  %v2141 = vld [vmem:[%s3 + $0x12] sm:$0x1]
  %v2143 = vsel %vm154, %v2136, 0
  %v2146 = vsel %vm154, %v2132, 0
  %v2149 = vsel %vm154, %v2133, 0
  %v2152 = vsel %vm154, %v2134, 0
  %v2155 = vsel %vm154, %v2135, 0
  %2157 = vmatpush.xpose.msra.mxu0 0.0
  %2158 = vmatpush.xpose.msra.mxu0 0.0
  %2159 = vmatpush.xpose.msra.mxu0 0.0
  %2160 = vmatpush.xpose.msra.mxu0 0.0
  %2161 = vmatpush.xpose.msra.mxu0 0.0
  %2162 = vmatpush.xpose.msra.mxu0 0.0
  %2163 = vmatpush.xpose.msra.mxu0 0.0
  %2164 = vmatpush.xpose.msra.mxu0 0.0
  %2165 = vmatpush.xpose.msra.mxu0 0.0
  %2166 = vmatpush.xpose.msra.mxu0 0.0
  %2167 = vmatpush.xpose.msra.mxu0 0.0
  %2168 = vmatpush.xpose.msra.mxu0 0.0
  %2169 = vmatpush.xpose.msra.mxu0 %v2155
  %2170 = vmatpush.xpose.msra.mxu0 %v2152
  %2171 = vmatpush.xpose.msra.mxu0 %v2149
  %2172 = vmatpush.xpose.msra.mxu0 %v2146
  %2173 = vmatmul.f32.gmra.mxu0 %v2143
  %v2174 = vpop.f32.mrf.mxu0
  %v2175 = vadd.f32 0.0, %v2174
  %2176 = vdwg.mxu0
  %v2178 = vsel %vm972, %v2175, 0
  %vm2180 = vcmask 1043456
  %v2182 = vsel %vm2180, %v2140, 0
  %2184 = vmatpush.msra.mxu0 0.0
  %2185 = vmatpush.msra.mxu0 0.0
  %2186 = vmatpush.msra.mxu0 0.0
  %2187 = vmatpush.msra.mxu0 0.0
  %2188 = vmatpush.msra.mxu0 0.0
  %2189 = vmatpush.msra.mxu0 0.0
  %2190 = vmatpush.msra.mxu0 0.0
  %2191 = vmatpush.msra.mxu0 0.0
  %2192 = vmatpush.msra.mxu0 0.0
  %2193 = vmatpush.msra.mxu0 0.0
  %2194 = vmatpush.msra.mxu0 0.0
  %2195 = vmatpush.msra.mxu0 0.0
  %2196 = vmatpush.msra.mxu0 %v2182
  %2197 = vmatpush.msra.mxu0 %v2139
  %2198 = vmatpush.msra.mxu0 %v2138
  %2199 = vmatpush.msra.mxu0 %v2137
  %2200 = vmatmul.f32.gmra.mxu0 %v2178
  %v2201 = vpop.f32.mrf.mxu0
  %v2202 = vadd.f32 %v2141, %v2201
  %2203 = vdwg.mxu0
  %vm2204 = vcmask 256000
  %2205 = vst.msk [vmem:[%s4] sm:$0x7] %vm2204, 0.0
  %vm2206 = vcmask 139264
  %2207 = vst.msk [vmem:[%s4] sm:$0x1] %vm2206, %v2202
  %vm2208 = vcmask 259076
  %2209 = vst.msk [vmem:[%s4 - $0x3] sm:$0x30] %vm2208, %v879
  // Predicated region
  $region18: #{transfermer_forward.1} parent=0 // pred_check
    _
  $region19: #{transfermer_forward.1} parent=0 // pred_check_branch
    %2211 = sbr.rel (0) target = $region21
  $region20: #{transfermer_forward.1} parent=0 // pred_region
    _
  $region21: #{transfermer_forward.1} parent=0 // pred_fallthru
    _
  // Predicated region
  $region22: #{transfermer_forward.1} parent=0 // pred_check
    _
  $region23: #{transfermer_forward.1} parent=0 // pred_check_branch
    %2213 = sbr.rel (0) target = $region25
  $region24: #{transfermer_forward.1} parent=0 // pred_region
    _
  $region25: #{transfermer_forward.1} parent=0 // pred_fallthru
    _

</llo_original>
